<compile_context>
chip_gen: v7x
topology: tpu7x:2x2x1
jax: 0.10.0
libtpu: 0.0.40
codegen_flags: <defaults>
</compile_context>

<pallas_src>
import functools

import jax
import jax.numpy as jnp
import numpy as np
from jax.experimental import pallas as pl
from jax.experimental.pallas import tpu as pltpu

C_MID = 64  # hidden channels of the first conv (fixed by the module)


def _shift_lanes(t, s):
    """u[:, p] = t[:, (p + s) % HW] along the last (lane) axis.

    Wrap-around entries are garbage by construction; the caller multiplies by a
    border-validity mask so only in-image entries survive.
    """
    n = t.shape[-1]
    k = s % n
    if k == 0:
        return t
    return jnp.concatenate([t[:, k:], t[:, :k]], axis=-1)


def _ms_mutli_kernel(x_ref, beta_ref, gamma_ref, w1_ref, b1_ref, w2_ref, b2_ref,
                     mask_ref, o_ref, *, img_w, dim_out):
    # x_ref:    (1, dim_out, HW)    feature map to modulate
    # beta_ref: (1, 1, HW)          conditioning channel 0
    # gamma_ref:(1, 1, HW)          conditioning channel 1
    # w1_ref:   (9, 64, 2)          conv1 weight, tap-major: w1[t, co, ci]
    # b1_ref:   (64, 1)
    # w2_ref:   (9*2*dim_out, 64)   conv2 weight, rows = tap-major then out-channel
    # b2_ref:   (2*dim_out, 1)
    # mask_ref: (9, 1, HW)          border-validity mask per tap (f32 {0,1})
    # o_ref:    (1, dim_out, HW)
    c2 = 2 * dim_out
    hw = x_ref.shape[-1]

    x = x_ref[0].astype(jnp.float32)          # (dim_out, HW)
    beta = beta_ref[0].astype(jnp.float32)    # (1, HW)
    gamma = gamma_ref[0].astype(jnp.float32)  # (1, HW)

    taps = [(ky - 1, kx - 1) for ky in range(3) for kx in range(3)]
    masks = [mask_ref[t] for t in range(9)]   # each (1, HW)

    # ---- conv1: 2 -> 64, 3x3, pad 1.  Cin=2 => VPU broadcast-MAC (skip the MXU). ----
    h1 = jnp.zeros((C_MID, hw), jnp.float32)
    for t, (oy, ox) in enumerate(taps):
        wt = w1_ref[t]                                         # (64, 2)
        tt = wt[:, 0:1] * beta + wt[:, 1:2] * gamma            # (64, HW)
        h1 = h1 + masks[t] * _shift_lanes(tt, oy * img_w + ox)
    h1 = h1 + b1_ref[...]                                      # (64, HW)

    # ---- conv2: 64 -> 2*dim_out, 3x3, pad 1.  One fused MXU matmul for all 9 taps. ----
    t_all = jnp.dot(w2_ref[...], h1, preferred_element_type=jnp.float32)  # (9*c2, HW)
    h2 = jnp.zeros((c2, hw), jnp.float32)
    for t, (oy, ox) in enumerate(taps):
        h2 = h2 + masks[t] * _shift_lanes(t_all[t * c2:(t + 1) * c2, :], oy * img_w + ox)
    h2 = h2 + b2_ref[...]                                      # (2*dim_out, HW)

    mu = h2[:dim_out, :]
    std = h2[dim_out:, :]
    o_ref[0] = (x * std + mu).astype(o_ref.dtype)


def _make_tap_masks(h, w):
    """(9, 1, H*W) f32 masks: 1 where a tap's source pixel lies inside the image."""
    rows = np.arange(h * w) // w
    cols = np.arange(h * w) % w
    masks = []
    for ky in range(3):
        for kx in range(3):
            oy, ox = ky - 1, kx - 1
            valid = ((rows + oy >= 0) & (rows + oy < h) &
                     (cols + ox >= 0) & (cols + ox < w))
            masks.append(valid.astype(np.float32))
    return jnp.asarray(np.stack(masks, axis=0)[:, None, :])


def _spectral_normalize(w, n_iters=50, eps=1e-12):
    """W / sigma_max(W.reshape(out, -1)) — the reparameterization applied by
    nn.utils.spectral_norm at forward time (power iteration run to convergence here,
    instead of PyTorch's stateful one-step-per-forward u/v buffers)."""
    mat = w.reshape(w.shape[0], -1)
    u = jnp.full((mat.shape[0],), 1.0 / np.sqrt(mat.shape[0]), dtype=w.dtype)

    def body(_, u):
        v = mat.T @ u
        v = v / (jnp.linalg.norm(v) + eps)
        u = mat @ v
        u = u / (jnp.linalg.norm(u) + eps)
        return u

    u = jax.lax.fori_loop(0, n_iters, body, u)
    v = mat.T @ u
    v = v / (jnp.linalg.norm(v) + eps)
    sigma = u @ (mat @ v)
    return w / sigma


def ms_mutli_forward(x, beta, gamma, w1, b1, w2, b2):
    """MS_mutli forward.

    x: (N, dim_out, H, W), beta/gamma: (N, 1, H, W)
    w1: (64, 2, 3, 3), b1: (64,)                 -- SnConv2d(2, 64, 3, 1, 1)
    w2: (2*dim_out, 64, 3, 3), b2: (2*dim_out,)  -- SnConv2d(64, 2*dim_out, 3, 1, 1)
    Returns (N, dim_out, H, W).
    """
    n, dim_out, h, w = x.shape
    hw = h * w
    c2 = 2 * dim_out
    assert w1.shape == (C_MID, 2, 3, 3) and w2.shape == (c2, C_MID, 3, 3)

    # Spectral-norm weight rescale (scalar per conv, plain XLA).
    w1n = _spectral_normalize(w1)
    w2n = _spectral_normalize(w2)

    # Tap-major weight layouts consumed by the kernel.
    w1_taps = jnp.transpose(w1n, (2, 3, 0, 1)).reshape(9, C_MID, 2)    # [t, co, ci]
    w2_rows = jnp.transpose(w2n, (2, 3, 0, 1)).reshape(9 * c2, C_MID)  # [t*c2 + co, ci]
    b1c = b1.reshape(C_MID, 1)
    b2c = b2.reshape(c2, 1)

    # NCHW -> (N, C, HW): free reshapes (no transposes); HW lands on the lane axis.
    x_f = x.reshape(n, dim_out, hw)
    beta_f = beta.reshape(n, 1, hw)
    gamma_f = gamma.reshape(n, 1, hw)
    masks = _make_tap_masks(h, w)

    kernel = functools.partial(_ms_mutli_kernel, img_w=w, dim_out=dim_out)

    out = pl.pallas_call(
        kernel,
        out_shape=jax.ShapeDtypeStruct((n, dim_out, hw), x.dtype),
        grid_spec=pltpu.PrefetchScalarGridSpec(
            num_scalar_prefetch=0,
            grid=(n,),
            in_specs=[
                pl.BlockSpec((1, dim_out, hw), lambda i: (i, 0, 0)),  # x
                pl.BlockSpec((1, 1, hw), lambda i: (i, 0, 0)),        # beta
                pl.BlockSpec((1, 1, hw), lambda i: (i, 0, 0)),        # gamma
                pl.BlockSpec((9, C_MID, 2), lambda i: (0, 0, 0)),     # conv1 weight taps
                pl.BlockSpec((C_MID, 1), lambda i: (0, 0)),           # conv1 bias
                pl.BlockSpec((9 * c2, C_MID), lambda i: (0, 0)),      # conv2 weight rows
                pl.BlockSpec((c2, 1), lambda i: (0, 0)),              # conv2 bias
                pl.BlockSpec((9, 1, hw), lambda i: (0, 0, 0)),        # border masks
            ],
            out_specs=pl.BlockSpec((1, dim_out, hw), lambda i: (i, 0, 0)),
        ),
        compiler_params=pltpu.CompilerParams(
            dimension_semantics=("parallel",)),  # batch axis -> both TCs on v7x
    )(x_f, beta_f, gamma_f, w1_taps, b1c, w2_rows, b2c, masks)

    return out.reshape(n, dim_out, h, w)


if __name__ == "__main__":
    N, DIM_OUT, H, W = 2, 4, 16, 16
    C2 = 2 * DIM_OUT

    key = jax.random.PRNGKey(0)
    kx, kb, kg, k1, k2, k3, k4 = jax.random.split(key, 7)

    x = jax.random.normal(kx, (N, DIM_OUT, H, W), dtype=jnp.float32)
    beta = jax.random.normal(kb, (N, 1, H, W), dtype=jnp.float32)
    gamma = jax.random.normal(kg, (N, 1, H, W), dtype=jnp.float32)

    w1 = 0.1 * jax.random.normal(k1, (C_MID, 2, 3, 3), dtype=jnp.float32)
    b1 = 0.1 * jax.random.normal(k2, (C_MID,), dtype=jnp.float32)
    w2 = 0.1 * jax.random.normal(k3, (C2, C_MID, 3, 3), dtype=jnp.float32)
    b2 = 0.1 * jax.random.normal(k4, (C2,), dtype=jnp.float32)

    out = ms_mutli_forward(x, beta, gamma, w1, b1, w2, b2)
    jax.block_until_ready(out)

    # Pure-JAX (XLA) reference using the same spectrally-normalized weights.
    def conv3x3(z, wgt, bias):
        y = jax.lax.conv_general_dilated(
            z, wgt, window_strides=(1, 1), padding=((1, 1), (1, 1)),
            dimension_numbers=("NCHW", "OIHW", "NCHW"),
            precision=jax.lax.Precision.HIGHEST)
        return y + bias[None, :, None, None]

    w1n = _spectral_normalize(w1)
    w2n = _spectral_normalize(w2)
    hmap = conv3x3(conv3x3(jnp.concatenate([beta, gamma], axis=1), w1n, b1), w2n, b2)
    mu_ref, std_ref = hmap[:, :DIM_OUT], hmap[:, DIM_OUT:]
    ref = x * std_ref + mu_ref

    assert out.shape == ref.shape
    assert jnp.allclose(out, ref, atol=2e-3, rtol=2e-3), (
        f"mismatch vs reference: max abs err {jnp.max(jnp.abs(out - ref))}")

    print("KERNEL_OK")
</pallas_src>

<mosaic_0001>
module attributes {stable_mosaic.version = 11 : i64} {
  func.func @_ms_mutli_kernel(%arg0: i32, %arg1: memref<1x4x256xf32, #tpu.memory_space<vmem>>, %arg2: memref<1x1x256xf32, #tpu.memory_space<vmem>>, %arg3: memref<1x1x256xf32, #tpu.memory_space<vmem>>, %arg4: memref<9x64x2xf32, #tpu.memory_space<vmem>>, %arg5: memref<64x1xf32, #tpu.memory_space<vmem>>, %arg6: memref<72x64xf32, #tpu.memory_space<vmem>>, %arg7: memref<8x1xf32, #tpu.memory_space<vmem>>, %arg8: memref<9x1x256xf32, #tpu.memory_space<vmem>>, %arg9: memref<1x4x256xf32, #tpu.memory_space<vmem>>) attributes {dimension_semantics = [#tpu.dimension_semantics<parallel>], iteration_bounds = array<i64: 2>, scalar_prefetch = 0 : i64, scratch_operands = 0 : i64, tpu.core_type = #tpu.core_type<tc>, window_params = [{transform_indices = @transform_0, window_bounds = array<i64: 1, 4, 256>}, {transform_indices = @transform_1, window_bounds = array<i64: 1, 1, 256>}, {transform_indices = @transform_2, window_bounds = array<i64: 1, 1, 256>}, {pipeline_mode = #tpu.pipeline_mode<synchronous>, transform_indices = @transform_3, window_bounds = array<i64: 9, 64, 2>}, {pipeline_mode = #tpu.pipeline_mode<synchronous>, transform_indices = @transform_4, window_bounds = array<i64: 64, 1>}, {pipeline_mode = #tpu.pipeline_mode<synchronous>, transform_indices = @transform_5, window_bounds = array<i64: 72, 64>}, {pipeline_mode = #tpu.pipeline_mode<synchronous>, transform_indices = @transform_6, window_bounds = array<i64: 8, 1>}, {pipeline_mode = #tpu.pipeline_mode<synchronous>, transform_indices = @transform_7, window_bounds = array<i64: 9, 1, 256>}, {transform_indices = @transform_8, window_bounds = array<i64: 1, 4, 256>}]} {
    %c0 = arith.constant 0 : index
    %c0_0 = arith.constant 0 : index
    %c0_1 = arith.constant 0 : index
    %0 = vector.load %arg1[%c0, %c0_0, %c0_1] : memref<1x4x256xf32, #tpu.memory_space<vmem>>, vector<1x4x256xf32>
    %1 = vector.shape_cast %0 : vector<1x4x256xf32> to vector<4x256xf32>
    %c0_2 = arith.constant 0 : index
    %c0_3 = arith.constant 0 : index
    %c0_4 = arith.constant 0 : index
    %2 = vector.load %arg2[%c0_2, %c0_3, %c0_4] : memref<1x1x256xf32, #tpu.memory_space<vmem>>, vector<1x1x256xf32>
    %3 = vector.shape_cast %2 : vector<1x1x256xf32> to vector<1x256xf32>
    %c0_5 = arith.constant 0 : index
    %c0_6 = arith.constant 0 : index
    %c0_7 = arith.constant 0 : index
    %4 = vector.load %arg3[%c0_5, %c0_6, %c0_7] : memref<1x1x256xf32, #tpu.memory_space<vmem>>, vector<1x1x256xf32>
    %5 = vector.shape_cast %4 : vector<1x1x256xf32> to vector<1x256xf32>
    %c0_8 = arith.constant 0 : index
    %c0_9 = arith.constant 0 : index
    %c0_10 = arith.constant 0 : index
    %6 = vector.load %arg8[%c0_8, %c0_9, %c0_10] : memref<9x1x256xf32, #tpu.memory_space<vmem>>, vector<1x1x256xf32>
    %7 = vector.shape_cast %6 : vector<1x1x256xf32> to vector<1x256xf32>
    %c1 = arith.constant 1 : index
    %c0_11 = arith.constant 0 : index
    %c0_12 = arith.constant 0 : index
    %8 = vector.load %arg8[%c1, %c0_11, %c0_12] : memref<9x1x256xf32, #tpu.memory_space<vmem>>, vector<1x1x256xf32>
    %9 = vector.shape_cast %8 : vector<1x1x256xf32> to vector<1x256xf32>
    %c2 = arith.constant 2 : index
    %c0_13 = arith.constant 0 : index
    %c0_14 = arith.constant 0 : index
    %10 = vector.load %arg8[%c2, %c0_13, %c0_14] : memref<9x1x256xf32, #tpu.memory_space<vmem>>, vector<1x1x256xf32>
    %11 = vector.shape_cast %10 : vector<1x1x256xf32> to vector<1x256xf32>
    %c3 = arith.constant 3 : index
    %c0_15 = arith.constant 0 : index
    %c0_16 = arith.constant 0 : index
    %12 = vector.load %arg8[%c3, %c0_15, %c0_16] : memref<9x1x256xf32, #tpu.memory_space<vmem>>, vector<1x1x256xf32>
    %13 = vector.shape_cast %12 : vector<1x1x256xf32> to vector<1x256xf32>
    %c4 = arith.constant 4 : index
    %c0_17 = arith.constant 0 : index
    %c0_18 = arith.constant 0 : index
    %14 = vector.load %arg8[%c4, %c0_17, %c0_18] : memref<9x1x256xf32, #tpu.memory_space<vmem>>, vector<1x1x256xf32>
    %15 = vector.shape_cast %14 : vector<1x1x256xf32> to vector<1x256xf32>
    %c5 = arith.constant 5 : index
    %c0_19 = arith.constant 0 : index
    %c0_20 = arith.constant 0 : index
    %16 = vector.load %arg8[%c5, %c0_19, %c0_20] : memref<9x1x256xf32, #tpu.memory_space<vmem>>, vector<1x1x256xf32>
    %17 = vector.shape_cast %16 : vector<1x1x256xf32> to vector<1x256xf32>
    %c6 = arith.constant 6 : index
    %c0_21 = arith.constant 0 : index
    %c0_22 = arith.constant 0 : index
    %18 = vector.load %arg8[%c6, %c0_21, %c0_22] : memref<9x1x256xf32, #tpu.memory_space<vmem>>, vector<1x1x256xf32>
    %19 = vector.shape_cast %18 : vector<1x1x256xf32> to vector<1x256xf32>
    %c7 = arith.constant 7 : index
    %c0_23 = arith.constant 0 : index
    %c0_24 = arith.constant 0 : index
    %20 = vector.load %arg8[%c7, %c0_23, %c0_24] : memref<9x1x256xf32, #tpu.memory_space<vmem>>, vector<1x1x256xf32>
    %21 = vector.shape_cast %20 : vector<1x1x256xf32> to vector<1x256xf32>
    %c8 = arith.constant 8 : index
    %c0_25 = arith.constant 0 : index
    %c0_26 = arith.constant 0 : index
    %22 = vector.load %arg8[%c8, %c0_25, %c0_26] : memref<9x1x256xf32, #tpu.memory_space<vmem>>, vector<1x1x256xf32>
    %23 = vector.shape_cast %22 : vector<1x1x256xf32> to vector<1x256xf32>
    %cst = arith.constant 0.000000e+00 : f32
    %24 = vector.broadcast %cst : f32 to vector<64x256xf32>
    %c0_27 = arith.constant 0 : index
    %c0_28 = arith.constant 0 : index
    %c0_29 = arith.constant 0 : index
    %25 = vector.load %arg4[%c0_27, %c0_28, %c0_29] : memref<9x64x2xf32, #tpu.memory_space<vmem>>, vector<1x64x2xf32>
    %26 = vector.shape_cast %25 : vector<1x64x2xf32> to vector<64x2xf32>
    %27 = vector.extract_strided_slice %26 {offsets = [0, 0], sizes = [64, 1], strides = [1, 1]} : vector<64x2xf32> to vector<64x1xf32>
    %28 = vector.broadcast %27 : vector<64x1xf32> to vector<64x256xf32>
    %29 = vector.broadcast %3 : vector<1x256xf32> to vector<64x256xf32>
    %30 = arith.mulf %28, %29 : vector<64x256xf32>
    %31 = vector.extract_strided_slice %26 {offsets = [0, 1], sizes = [64, 1], strides = [1, 1]} : vector<64x2xf32> to vector<64x1xf32>
    %32 = vector.broadcast %31 : vector<64x1xf32> to vector<64x256xf32>
    %33 = vector.broadcast %5 : vector<1x256xf32> to vector<64x256xf32>
    %34 = arith.mulf %32, %33 : vector<64x256xf32>
    %35 = arith.addf %30, %34 : vector<64x256xf32>
    %36 = vector.extract_strided_slice %35 {offsets = [0, 239], sizes = [64, 17], strides = [1, 1]} : vector<64x256xf32> to vector<64x17xf32>
    %37 = vector.extract_strided_slice %35 {offsets = [0, 0], sizes = [64, 239], strides = [1, 1]} : vector<64x256xf32> to vector<64x239xf32>
    %38 = tpu.concatenate %36, %37 in 1 : vector<64x17xf32>, vector<64x239xf32> -> vector<64x256xf32>
    %39 = vector.broadcast %7 : vector<1x256xf32> to vector<64x256xf32>
    %40 = arith.mulf %39, %38 : vector<64x256xf32>
    %41 = arith.addf %24, %40 : vector<64x256xf32>
    %c1_30 = arith.constant 1 : index
    %c0_31 = arith.constant 0 : index
    %c0_32 = arith.constant 0 : index
    %42 = vector.load %arg4[%c1_30, %c0_31, %c0_32] : memref<9x64x2xf32, #tpu.memory_space<vmem>>, vector<1x64x2xf32>
    %43 = vector.shape_cast %42 : vector<1x64x2xf32> to vector<64x2xf32>
    %44 = vector.extract_strided_slice %43 {offsets = [0, 0], sizes = [64, 1], strides = [1, 1]} : vector<64x2xf32> to vector<64x1xf32>
    %45 = vector.broadcast %44 : vector<64x1xf32> to vector<64x256xf32>
    %46 = vector.broadcast %3 : vector<1x256xf32> to vector<64x256xf32>
    %47 = arith.mulf %45, %46 : vector<64x256xf32>
    %48 = vector.extract_strided_slice %43 {offsets = [0, 1], sizes = [64, 1], strides = [1, 1]} : vector<64x2xf32> to vector<64x1xf32>
    %49 = vector.broadcast %48 : vector<64x1xf32> to vector<64x256xf32>
    %50 = vector.broadcast %5 : vector<1x256xf32> to vector<64x256xf32>
    %51 = arith.mulf %49, %50 : vector<64x256xf32>
    %52 = arith.addf %47, %51 : vector<64x256xf32>
    %53 = vector.extract_strided_slice %52 {offsets = [0, 240], sizes = [64, 16], strides = [1, 1]} : vector<64x256xf32> to vector<64x16xf32>
    %54 = vector.extract_strided_slice %52 {offsets = [0, 0], sizes = [64, 240], strides = [1, 1]} : vector<64x256xf32> to vector<64x240xf32>
    %55 = tpu.concatenate %53, %54 in 1 : vector<64x16xf32>, vector<64x240xf32> -> vector<64x256xf32>
    %56 = vector.broadcast %9 : vector<1x256xf32> to vector<64x256xf32>
    %57 = arith.mulf %56, %55 : vector<64x256xf32>
    %58 = arith.addf %41, %57 : vector<64x256xf32>
    %c2_33 = arith.constant 2 : index
    %c0_34 = arith.constant 0 : index
    %c0_35 = arith.constant 0 : index
    %59 = vector.load %arg4[%c2_33, %c0_34, %c0_35] : memref<9x64x2xf32, #tpu.memory_space<vmem>>, vector<1x64x2xf32>
    %60 = vector.shape_cast %59 : vector<1x64x2xf32> to vector<64x2xf32>
    %61 = vector.extract_strided_slice %60 {offsets = [0, 0], sizes = [64, 1], strides = [1, 1]} : vector<64x2xf32> to vector<64x1xf32>
    %62 = vector.broadcast %61 : vector<64x1xf32> to vector<64x256xf32>
    %63 = vector.broadcast %3 : vector<1x256xf32> to vector<64x256xf32>
    %64 = arith.mulf %62, %63 : vector<64x256xf32>
    %65 = vector.extract_strided_slice %60 {offsets = [0, 1], sizes = [64, 1], strides = [1, 1]} : vector<64x2xf32> to vector<64x1xf32>
    %66 = vector.broadcast %65 : vector<64x1xf32> to vector<64x256xf32>
    %67 = vector.broadcast %5 : vector<1x256xf32> to vector<64x256xf32>
    %68 = arith.mulf %66, %67 : vector<64x256xf32>
    %69 = arith.addf %64, %68 : vector<64x256xf32>
    %70 = vector.extract_strided_slice %69 {offsets = [0, 241], sizes = [64, 15], strides = [1, 1]} : vector<64x256xf32> to vector<64x15xf32>
    %71 = vector.extract_strided_slice %69 {offsets = [0, 0], sizes = [64, 241], strides = [1, 1]} : vector<64x256xf32> to vector<64x241xf32>
    %72 = tpu.concatenate %70, %71 in 1 : vector<64x15xf32>, vector<64x241xf32> -> vector<64x256xf32>
    %73 = vector.broadcast %11 : vector<1x256xf32> to vector<64x256xf32>
    %74 = arith.mulf %73, %72 : vector<64x256xf32>
    %75 = arith.addf %58, %74 : vector<64x256xf32>
    %c3_36 = arith.constant 3 : index
    %c0_37 = arith.constant 0 : index
    %c0_38 = arith.constant 0 : index
    %76 = vector.load %arg4[%c3_36, %c0_37, %c0_38] : memref<9x64x2xf32, #tpu.memory_space<vmem>>, vector<1x64x2xf32>
    %77 = vector.shape_cast %76 : vector<1x64x2xf32> to vector<64x2xf32>
    %78 = vector.extract_strided_slice %77 {offsets = [0, 0], sizes = [64, 1], strides = [1, 1]} : vector<64x2xf32> to vector<64x1xf32>
    %79 = vector.broadcast %78 : vector<64x1xf32> to vector<64x256xf32>
    %80 = vector.broadcast %3 : vector<1x256xf32> to vector<64x256xf32>
    %81 = arith.mulf %79, %80 : vector<64x256xf32>
    %82 = vector.extract_strided_slice %77 {offsets = [0, 1], sizes = [64, 1], strides = [1, 1]} : vector<64x2xf32> to vector<64x1xf32>
    %83 = vector.broadcast %82 : vector<64x1xf32> to vector<64x256xf32>
    %84 = vector.broadcast %5 : vector<1x256xf32> to vector<64x256xf32>
    %85 = arith.mulf %83, %84 : vector<64x256xf32>
    %86 = arith.addf %81, %85 : vector<64x256xf32>
    %87 = vector.extract_strided_slice %86 {offsets = [0, 255], sizes = [64, 1], strides = [1, 1]} : vector<64x256xf32> to vector<64x1xf32>
    %88 = vector.extract_strided_slice %86 {offsets = [0, 0], sizes = [64, 255], strides = [1, 1]} : vector<64x256xf32> to vector<64x255xf32>
    %89 = tpu.concatenate %87, %88 in 1 : vector<64x1xf32>, vector<64x255xf32> -> vector<64x256xf32>
    %90 = vector.broadcast %13 : vector<1x256xf32> to vector<64x256xf32>
    %91 = arith.mulf %90, %89 : vector<64x256xf32>
    %92 = arith.addf %75, %91 : vector<64x256xf32>
    %c4_39 = arith.constant 4 : index
    %c0_40 = arith.constant 0 : index
    %c0_41 = arith.constant 0 : index
    %93 = vector.load %arg4[%c4_39, %c0_40, %c0_41] : memref<9x64x2xf32, #tpu.memory_space<vmem>>, vector<1x64x2xf32>
    %94 = vector.shape_cast %93 : vector<1x64x2xf32> to vector<64x2xf32>
    %95 = vector.extract_strided_slice %94 {offsets = [0, 0], sizes = [64, 1], strides = [1, 1]} : vector<64x2xf32> to vector<64x1xf32>
    %96 = vector.broadcast %95 : vector<64x1xf32> to vector<64x256xf32>
    %97 = vector.broadcast %3 : vector<1x256xf32> to vector<64x256xf32>
    %98 = arith.mulf %96, %97 : vector<64x256xf32>
    %99 = vector.extract_strided_slice %94 {offsets = [0, 1], sizes = [64, 1], strides = [1, 1]} : vector<64x2xf32> to vector<64x1xf32>
    %100 = vector.broadcast %99 : vector<64x1xf32> to vector<64x256xf32>
    %101 = vector.broadcast %5 : vector<1x256xf32> to vector<64x256xf32>
    %102 = arith.mulf %100, %101 : vector<64x256xf32>
    %103 = arith.addf %98, %102 : vector<64x256xf32>
    %104 = vector.broadcast %15 : vector<1x256xf32> to vector<64x256xf32>
    %105 = arith.mulf %104, %103 : vector<64x256xf32>
    %106 = arith.addf %92, %105 : vector<64x256xf32>
    %c5_42 = arith.constant 5 : index
    %c0_43 = arith.constant 0 : index
    %c0_44 = arith.constant 0 : index
    %107 = vector.load %arg4[%c5_42, %c0_43, %c0_44] : memref<9x64x2xf32, #tpu.memory_space<vmem>>, vector<1x64x2xf32>
    %108 = vector.shape_cast %107 : vector<1x64x2xf32> to vector<64x2xf32>
    %109 = vector.extract_strided_slice %108 {offsets = [0, 0], sizes = [64, 1], strides = [1, 1]} : vector<64x2xf32> to vector<64x1xf32>
    %110 = vector.broadcast %109 : vector<64x1xf32> to vector<64x256xf32>
    %111 = vector.broadcast %3 : vector<1x256xf32> to vector<64x256xf32>
    %112 = arith.mulf %110, %111 : vector<64x256xf32>
    %113 = vector.extract_strided_slice %108 {offsets = [0, 1], sizes = [64, 1], strides = [1, 1]} : vector<64x2xf32> to vector<64x1xf32>
    %114 = vector.broadcast %113 : vector<64x1xf32> to vector<64x256xf32>
    %115 = vector.broadcast %5 : vector<1x256xf32> to vector<64x256xf32>
    %116 = arith.mulf %114, %115 : vector<64x256xf32>
    %117 = arith.addf %112, %116 : vector<64x256xf32>
    %118 = vector.extract_strided_slice %117 {offsets = [0, 1], sizes = [64, 255], strides = [1, 1]} : vector<64x256xf32> to vector<64x255xf32>
    %119 = vector.extract_strided_slice %117 {offsets = [0, 0], sizes = [64, 1], strides = [1, 1]} : vector<64x256xf32> to vector<64x1xf32>
    %120 = tpu.concatenate %118, %119 in 1 : vector<64x255xf32>, vector<64x1xf32> -> vector<64x256xf32>
    %121 = vector.broadcast %17 : vector<1x256xf32> to vector<64x256xf32>
    %122 = arith.mulf %121, %120 : vector<64x256xf32>
    %123 = arith.addf %106, %122 : vector<64x256xf32>
    %c6_45 = arith.constant 6 : index
    %c0_46 = arith.constant 0 : index
    %c0_47 = arith.constant 0 : index
    %124 = vector.load %arg4[%c6_45, %c0_46, %c0_47] : memref<9x64x2xf32, #tpu.memory_space<vmem>>, vector<1x64x2xf32>
    %125 = vector.shape_cast %124 : vector<1x64x2xf32> to vector<64x2xf32>
    %126 = vector.extract_strided_slice %125 {offsets = [0, 0], sizes = [64, 1], strides = [1, 1]} : vector<64x2xf32> to vector<64x1xf32>
    %127 = vector.broadcast %126 : vector<64x1xf32> to vector<64x256xf32>
    %128 = vector.broadcast %3 : vector<1x256xf32> to vector<64x256xf32>
    %129 = arith.mulf %127, %128 : vector<64x256xf32>
    %130 = vector.extract_strided_slice %125 {offsets = [0, 1], sizes = [64, 1], strides = [1, 1]} : vector<64x2xf32> to vector<64x1xf32>
    %131 = vector.broadcast %130 : vector<64x1xf32> to vector<64x256xf32>
    %132 = vector.broadcast %5 : vector<1x256xf32> to vector<64x256xf32>
    %133 = arith.mulf %131, %132 : vector<64x256xf32>
    %134 = arith.addf %129, %133 : vector<64x256xf32>
    %135 = vector.extract_strided_slice %134 {offsets = [0, 15], sizes = [64, 241], strides = [1, 1]} : vector<64x256xf32> to vector<64x241xf32>
    %136 = vector.extract_strided_slice %134 {offsets = [0, 0], sizes = [64, 15], strides = [1, 1]} : vector<64x256xf32> to vector<64x15xf32>
    %137 = tpu.concatenate %135, %136 in 1 : vector<64x241xf32>, vector<64x15xf32> -> vector<64x256xf32>
    %138 = vector.broadcast %19 : vector<1x256xf32> to vector<64x256xf32>
    %139 = arith.mulf %138, %137 : vector<64x256xf32>
    %140 = arith.addf %123, %139 : vector<64x256xf32>
    %c7_48 = arith.constant 7 : index
    %c0_49 = arith.constant 0 : index
    %c0_50 = arith.constant 0 : index
    %141 = vector.load %arg4[%c7_48, %c0_49, %c0_50] : memref<9x64x2xf32, #tpu.memory_space<vmem>>, vector<1x64x2xf32>
    %142 = vector.shape_cast %141 : vector<1x64x2xf32> to vector<64x2xf32>
    %143 = vector.extract_strided_slice %142 {offsets = [0, 0], sizes = [64, 1], strides = [1, 1]} : vector<64x2xf32> to vector<64x1xf32>
    %144 = vector.broadcast %143 : vector<64x1xf32> to vector<64x256xf32>
    %145 = vector.broadcast %3 : vector<1x256xf32> to vector<64x256xf32>
    %146 = arith.mulf %144, %145 : vector<64x256xf32>
    %147 = vector.extract_strided_slice %142 {offsets = [0, 1], sizes = [64, 1], strides = [1, 1]} : vector<64x2xf32> to vector<64x1xf32>
    %148 = vector.broadcast %147 : vector<64x1xf32> to vector<64x256xf32>
    %149 = vector.broadcast %5 : vector<1x256xf32> to vector<64x256xf32>
    %150 = arith.mulf %148, %149 : vector<64x256xf32>
    %151 = arith.addf %146, %150 : vector<64x256xf32>
    %152 = vector.extract_strided_slice %151 {offsets = [0, 16], sizes = [64, 240], strides = [1, 1]} : vector<64x256xf32> to vector<64x240xf32>
    %153 = vector.extract_strided_slice %151 {offsets = [0, 0], sizes = [64, 16], strides = [1, 1]} : vector<64x256xf32> to vector<64x16xf32>
    %154 = tpu.concatenate %152, %153 in 1 : vector<64x240xf32>, vector<64x16xf32> -> vector<64x256xf32>
    %155 = vector.broadcast %21 : vector<1x256xf32> to vector<64x256xf32>
    %156 = arith.mulf %155, %154 : vector<64x256xf32>
    %157 = arith.addf %140, %156 : vector<64x256xf32>
    %c8_51 = arith.constant 8 : index
    %c0_52 = arith.constant 0 : index
    %c0_53 = arith.constant 0 : index
    %158 = vector.load %arg4[%c8_51, %c0_52, %c0_53] : memref<9x64x2xf32, #tpu.memory_space<vmem>>, vector<1x64x2xf32>
    %159 = vector.shape_cast %158 : vector<1x64x2xf32> to vector<64x2xf32>
    %160 = vector.extract_strided_slice %159 {offsets = [0, 0], sizes = [64, 1], strides = [1, 1]} : vector<64x2xf32> to vector<64x1xf32>
    %161 = vector.broadcast %160 : vector<64x1xf32> to vector<64x256xf32>
    %162 = vector.broadcast %3 : vector<1x256xf32> to vector<64x256xf32>
    %163 = arith.mulf %161, %162 : vector<64x256xf32>
    %164 = vector.extract_strided_slice %159 {offsets = [0, 1], sizes = [64, 1], strides = [1, 1]} : vector<64x2xf32> to vector<64x1xf32>
    %165 = vector.broadcast %164 : vector<64x1xf32> to vector<64x256xf32>
    %166 = vector.broadcast %5 : vector<1x256xf32> to vector<64x256xf32>
    %167 = arith.mulf %165, %166 : vector<64x256xf32>
    %168 = arith.addf %163, %167 : vector<64x256xf32>
    %169 = vector.extract_strided_slice %168 {offsets = [0, 17], sizes = [64, 239], strides = [1, 1]} : vector<64x256xf32> to vector<64x239xf32>
    %170 = vector.extract_strided_slice %168 {offsets = [0, 0], sizes = [64, 17], strides = [1, 1]} : vector<64x256xf32> to vector<64x17xf32>
    %171 = tpu.concatenate %169, %170 in 1 : vector<64x239xf32>, vector<64x17xf32> -> vector<64x256xf32>
    %172 = vector.broadcast %23 : vector<1x256xf32> to vector<64x256xf32>
    %173 = arith.mulf %172, %171 : vector<64x256xf32>
    %174 = arith.addf %157, %173 : vector<64x256xf32>
    %c0_54 = arith.constant 0 : index
    %c0_55 = arith.constant 0 : index
    %175 = vector.load %arg5[%c0_54, %c0_55] : memref<64x1xf32, #tpu.memory_space<vmem>>, vector<64x1xf32>
    %176 = vector.broadcast %175 : vector<64x1xf32> to vector<64x256xf32>
    %177 = arith.addf %174, %176 : vector<64x256xf32>
    %c0_56 = arith.constant 0 : index
    %c0_57 = arith.constant 0 : index
    %178 = vector.load %arg6[%c0_56, %c0_57] : memref<72x64xf32, #tpu.memory_space<vmem>>, vector<72x64xf32>
    %cst_58 = arith.constant dense<0.000000e+00> : vector<72x256xf32>
    %179 = tpu.matmul %178, %177, %cst_58 {dimension_numbers = #tpu.dot_dimension_numbers<[1], [0], [0], [1], [0, 0, 1, 1], [], []>} : vector<72x64xf32>, vector<64x256xf32>, vector<72x256xf32> -> vector<72x256xf32>
    %cst_59 = arith.constant 0.000000e+00 : f32
    %180 = vector.broadcast %cst_59 : f32 to vector<8x256xf32>
    %181 = vector.extract_strided_slice %179 {offsets = [0, 0], sizes = [8, 256], strides = [1, 1]} : vector<72x256xf32> to vector<8x256xf32>
    %182 = vector.extract_strided_slice %181 {offsets = [0, 239], sizes = [8, 17], strides = [1, 1]} : vector<8x256xf32> to vector<8x17xf32>
    %183 = vector.extract_strided_slice %181 {offsets = [0, 0], sizes = [8, 239], strides = [1, 1]} : vector<8x256xf32> to vector<8x239xf32>
    %184 = tpu.concatenate %182, %183 in 1 : vector<8x17xf32>, vector<8x239xf32> -> vector<8x256xf32>
    %185 = vector.broadcast %7 : vector<1x256xf32> to vector<8x256xf32>
    %186 = arith.mulf %185, %184 : vector<8x256xf32>
    %187 = arith.addf %180, %186 : vector<8x256xf32>
    %188 = vector.extract_strided_slice %179 {offsets = [8, 0], sizes = [8, 256], strides = [1, 1]} : vector<72x256xf32> to vector<8x256xf32>
    %189 = vector.extract_strided_slice %188 {offsets = [0, 240], sizes = [8, 16], strides = [1, 1]} : vector<8x256xf32> to vector<8x16xf32>
    %190 = vector.extract_strided_slice %188 {offsets = [0, 0], sizes = [8, 240], strides = [1, 1]} : vector<8x256xf32> to vector<8x240xf32>
    %191 = tpu.concatenate %189, %190 in 1 : vector<8x16xf32>, vector<8x240xf32> -> vector<8x256xf32>
    %192 = vector.broadcast %9 : vector<1x256xf32> to vector<8x256xf32>
    %193 = arith.mulf %192, %191 : vector<8x256xf32>
    %194 = arith.addf %187, %193 : vector<8x256xf32>
    %195 = vector.extract_strided_slice %179 {offsets = [16, 0], sizes = [8, 256], strides = [1, 1]} : vector<72x256xf32> to vector<8x256xf32>
    %196 = vector.extract_strided_slice %195 {offsets = [0, 241], sizes = [8, 15], strides = [1, 1]} : vector<8x256xf32> to vector<8x15xf32>
    %197 = vector.extract_strided_slice %195 {offsets = [0, 0], sizes = [8, 241], strides = [1, 1]} : vector<8x256xf32> to vector<8x241xf32>
    %198 = tpu.concatenate %196, %197 in 1 : vector<8x15xf32>, vector<8x241xf32> -> vector<8x256xf32>
    %199 = vector.broadcast %11 : vector<1x256xf32> to vector<8x256xf32>
    %200 = arith.mulf %199, %198 : vector<8x256xf32>
    %201 = arith.addf %194, %200 : vector<8x256xf32>
    %202 = vector.extract_strided_slice %179 {offsets = [24, 0], sizes = [8, 256], strides = [1, 1]} : vector<72x256xf32> to vector<8x256xf32>
    %203 = vector.extract_strided_slice %202 {offsets = [0, 255], sizes = [8, 1], strides = [1, 1]} : vector<8x256xf32> to vector<8x1xf32>
    %204 = vector.extract_strided_slice %202 {offsets = [0, 0], sizes = [8, 255], strides = [1, 1]} : vector<8x256xf32> to vector<8x255xf32>
    %205 = tpu.concatenate %203, %204 in 1 : vector<8x1xf32>, vector<8x255xf32> -> vector<8x256xf32>
    %206 = vector.broadcast %13 : vector<1x256xf32> to vector<8x256xf32>
    %207 = arith.mulf %206, %205 : vector<8x256xf32>
    %208 = arith.addf %201, %207 : vector<8x256xf32>
    %209 = vector.extract_strided_slice %179 {offsets = [32, 0], sizes = [8, 256], strides = [1, 1]} : vector<72x256xf32> to vector<8x256xf32>
    %210 = vector.broadcast %15 : vector<1x256xf32> to vector<8x256xf32>
    %211 = arith.mulf %210, %209 : vector<8x256xf32>
    %212 = arith.addf %208, %211 : vector<8x256xf32>
    %213 = vector.extract_strided_slice %179 {offsets = [40, 0], sizes = [8, 256], strides = [1, 1]} : vector<72x256xf32> to vector<8x256xf32>
    %214 = vector.extract_strided_slice %213 {offsets = [0, 1], sizes = [8, 255], strides = [1, 1]} : vector<8x256xf32> to vector<8x255xf32>
    %215 = vector.extract_strided_slice %213 {offsets = [0, 0], sizes = [8, 1], strides = [1, 1]} : vector<8x256xf32> to vector<8x1xf32>
    %216 = tpu.concatenate %214, %215 in 1 : vector<8x255xf32>, vector<8x1xf32> -> vector<8x256xf32>
    %217 = vector.broadcast %17 : vector<1x256xf32> to vector<8x256xf32>
    %218 = arith.mulf %217, %216 : vector<8x256xf32>
    %219 = arith.addf %212, %218 : vector<8x256xf32>
    %220 = vector.extract_strided_slice %179 {offsets = [48, 0], sizes = [8, 256], strides = [1, 1]} : vector<72x256xf32> to vector<8x256xf32>
    %221 = vector.extract_strided_slice %220 {offsets = [0, 15], sizes = [8, 241], strides = [1, 1]} : vector<8x256xf32> to vector<8x241xf32>
    %222 = vector.extract_strided_slice %220 {offsets = [0, 0], sizes = [8, 15], strides = [1, 1]} : vector<8x256xf32> to vector<8x15xf32>
    %223 = tpu.concatenate %221, %222 in 1 : vector<8x241xf32>, vector<8x15xf32> -> vector<8x256xf32>
    %224 = vector.broadcast %19 : vector<1x256xf32> to vector<8x256xf32>
    %225 = arith.mulf %224, %223 : vector<8x256xf32>
    %226 = arith.addf %219, %225 : vector<8x256xf32>
    %227 = vector.extract_strided_slice %179 {offsets = [56, 0], sizes = [8, 256], strides = [1, 1]} : vector<72x256xf32> to vector<8x256xf32>
    %228 = vector.extract_strided_slice %227 {offsets = [0, 16], sizes = [8, 240], strides = [1, 1]} : vector<8x256xf32> to vector<8x240xf32>
    %229 = vector.extract_strided_slice %227 {offsets = [0, 0], sizes = [8, 16], strides = [1, 1]} : vector<8x256xf32> to vector<8x16xf32>
    %230 = tpu.concatenate %228, %229 in 1 : vector<8x240xf32>, vector<8x16xf32> -> vector<8x256xf32>
    %231 = vector.broadcast %21 : vector<1x256xf32> to vector<8x256xf32>
    %232 = arith.mulf %231, %230 : vector<8x256xf32>
    %233 = arith.addf %226, %232 : vector<8x256xf32>
    %234 = vector.extract_strided_slice %179 {offsets = [64, 0], sizes = [8, 256], strides = [1, 1]} : vector<72x256xf32> to vector<8x256xf32>
    %235 = vector.extract_strided_slice %234 {offsets = [0, 17], sizes = [8, 239], strides = [1, 1]} : vector<8x256xf32> to vector<8x239xf32>
    %236 = vector.extract_strided_slice %234 {offsets = [0, 0], sizes = [8, 17], strides = [1, 1]} : vector<8x256xf32> to vector<8x17xf32>
    %237 = tpu.concatenate %235, %236 in 1 : vector<8x239xf32>, vector<8x17xf32> -> vector<8x256xf32>
    %238 = vector.broadcast %23 : vector<1x256xf32> to vector<8x256xf32>
    %239 = arith.mulf %238, %237 : vector<8x256xf32>
    %240 = arith.addf %233, %239 : vector<8x256xf32>
    %c0_60 = arith.constant 0 : index
    %c0_61 = arith.constant 0 : index
    %241 = vector.load %arg7[%c0_60, %c0_61] : memref<8x1xf32, #tpu.memory_space<vmem>>, vector<8x1xf32>
    %242 = vector.broadcast %241 : vector<8x1xf32> to vector<8x256xf32>
    %243 = arith.addf %240, %242 : vector<8x256xf32>
    %244 = vector.extract_strided_slice %243 {offsets = [0, 0], sizes = [4, 256], strides = [1, 1]} : vector<8x256xf32> to vector<4x256xf32>
    %245 = vector.extract_strided_slice %243 {offsets = [4, 0], sizes = [4, 256], strides = [1, 1]} : vector<8x256xf32> to vector<4x256xf32>
    %246 = arith.mulf %1, %245 : vector<4x256xf32>
    %247 = arith.addf %246, %244 : vector<4x256xf32>
    %c0_62 = arith.constant 0 : index
    %c0_63 = arith.constant 0 : index
    %c0_64 = arith.constant 0 : index
    %248 = vector.load %arg9[%c0_62, %c0_63, %c0_64] : memref<1x4x256xf32, #tpu.memory_space<vmem>>, vector<1x4x256xf32>
    %249 = vector.shape_cast %248 : vector<1x4x256xf32> to vector<4x256xf32>
    %250 = vector.shape_cast %247 : vector<4x256xf32> to vector<1x4x256xf32>
    tpu.vector_store %arg9[%c0_62, %c0_63, %c0_64], %250 {strides = array<i32>} : memref<1x4x256xf32, #tpu.memory_space<vmem>>, vector<1x4x256xf32>,
    return
  }
  func.func @transform_0(%arg0: i32) -> (i32, i32, i32) {
    %c0_i32 = arith.constant 0 : i32
    %c0_i32_0 = arith.constant 0 : i32
    %c0_i32_1 = arith.constant 0 : i32
    return %arg0, %c0_i32, %c0_i32_0 : i32, i32, i32
  }
  func.func @transform_1(%arg0: i32) -> (i32, i32, i32) {
    %c0_i32 = arith.constant 0 : i32
    %c0_i32_0 = arith.constant 0 : i32
    %c0_i32_1 = arith.constant 0 : i32
    return %arg0, %c0_i32, %c0_i32_0 : i32, i32, i32
  }
  func.func @transform_2(%arg0: i32) -> (i32, i32, i32) {
    %c0_i32 = arith.constant 0 : i32
    %c0_i32_0 = arith.constant 0 : i32
    %c0_i32_1 = arith.constant 0 : i32
    return %arg0, %c0_i32, %c0_i32_0 : i32, i32, i32
  }
  func.func @transform_3(%arg0: i32) -> (i32, i32, i32) {
    %c0_i32 = arith.constant 0 : i32
    %c0_i32_0 = arith.constant 0 : i32
    %c0_i32_1 = arith.constant 0 : i32
    %c0_i32_2 = arith.constant 0 : i32
    return %c0_i32, %c0_i32_0, %c0_i32_1 : i32, i32, i32
  }
  func.func @transform_4(%arg0: i32) -> (i32, i32) {
    %c0_i32 = arith.constant 0 : i32
    %c0_i32_0 = arith.constant 0 : i32
    %c0_i32_1 = arith.constant 0 : i32
    return %c0_i32, %c0_i32_0 : i32, i32
  }
  func.func @transform_5(%arg0: i32) -> (i32, i32) {
    %c0_i32 = arith.constant 0 : i32
    %c0_i32_0 = arith.constant 0 : i32
    %c0_i32_1 = arith.constant 0 : i32
    return %c0_i32, %c0_i32_0 : i32, i32
  }
  func.func @transform_6(%arg0: i32) -> (i32, i32) {
    %c0_i32 = arith.constant 0 : i32
    %c0_i32_0 = arith.constant 0 : i32
    %c0_i32_1 = arith.constant 0 : i32
    return %c0_i32, %c0_i32_0 : i32, i32
  }
  func.func @transform_7(%arg0: i32) -> (i32, i32, i32) {
    %c0_i32 = arith.constant 0 : i32
    %c0_i32_0 = arith.constant 0 : i32
    %c0_i32_1 = arith.constant 0 : i32
    %c0_i32_2 = arith.constant 0 : i32
    return %c0_i32, %c0_i32_0, %c0_i32_1 : i32, i32, i32
  }
  func.func @transform_8(%arg0: i32) -> (i32, i32, i32) {
    %c0_i32 = arith.constant 0 : i32
    %c0_i32_0 = arith.constant 0 : i32
    %c0_i32_1 = arith.constant 0 : i32
    return %arg0, %c0_i32, %c0_i32_0 : i32, i32, i32
  }
}

</mosaic_0001>

<llo_original>
// kernel: tpu_custom_call.1
$region0: #{tpu_custom_call.1}
  #allocation0 [shape = 'u32[]', space=smem, size = 0x4, offset = 0x4, fixed_abs, tag = 'smem constant byte address 0x4 - core index']
  #allocation1 [shape = 'u32[144,128]{1,0:T(1,128)}', space=vmem, size = 0x12000, scoped, tag = 'internal scratch']
  %s0 = inlined_call_operand.vmem [shape: f32[2,4,256], index: 0, kind: input, shape index: {}]
  %s1 = inlined_call_operand.vmem [shape: f32[2,1,256], index: 1, kind: input, shape index: {}]
  %s2 = inlined_call_operand.vmem [shape: f32[2,1,256], index: 2, kind: input, shape index: {}]
  %s3 = inlined_call_operand.vmem [shape: f32[9,64,2], index: 3, kind: input, shape index: {}]
  %s4 = inlined_call_operand.vmem [shape: f32[64,1], index: 4, kind: input, shape index: {}]
  %s5 = inlined_call_operand.vmem [shape: f32[72,64], index: 5, kind: input, shape index: {}]
  %s6 = inlined_call_operand.vmem [shape: f32[8,1], index: 6, kind: input, shape index: {}]
  %s7 = inlined_call_operand.vmem [shape: f32[9,1,256], index: 7, kind: input, shape index: {}]
  %s8 = inlined_call_operand.hbm [shape: f32[2,4,256], index: 8, kind: output, shape index: {}]
  %s9 = sld [smem:[#allocation0]]
  $region65: #{tpu_custom_call.1} parent=0
    _
  %s11 = ssub.s32 1, %s9
  %s12 = scalar_select 0, %s11, %s9
  $region1: #{tpu_custom_call.1} parent=0
    #allocation2 [shape = 'u8[8192]{0}', space=vmem, size = 0x2000, scoped, tag = 'output window, operand 0']
    #allocation3 [shape = 's32[2]{0}', space=sflag, size = 0x8, scoped, tag = 'scoped memory for tpu_custom_call.1']
    %13 = vsyncpa [#allocation3], 0
    %s14 = scalar_lea.sflag [#allocation3], 1
    %15 = vsyncpa %s14, 0
    loop: start=0, step=1, limit=4
    $region2: #{tpu_custom_call.1} parent=1 // loop_pre_header
      _
    $region3: #{tpu_custom_call.1} parent=1 // loop_header
      %s17 = sphi 0, %s21
      %p18 = scmp.ge.s32.totalorder %s17, 4
      %s27 = sphi 0, %s29
      %s30 = sphi 0, %s27
      %s31 = sphi 0, %s30
      %s47 = sphi 0, %s31
      %s53 = sphi 0, %s55
      %s56 = sphi 0, %s53
      %s57 = sphi 0, %s56
      %s73 = sphi 0, %s57
      %s79 = sphi 0, %s81
      %s82 = sphi 0, %s79
      %s83 = sphi 0, %s82
      %s99 = sphi 0, %s83
      %s103 = sphi 0, %s103
      %s105 = sphi 0, %s103
      %s106 = sphi 0, %s105
      %s120 = sphi 0, %s106
      %s124 = sphi 0, %s124
      %s126 = sphi 0, %s124
      %s127 = sphi 0, %s126
      %s141 = sphi 0, %s127
      %s145 = sphi 0, %s145
      %s147 = sphi 0, %s145
      %s148 = sphi 0, %s147
      %s162 = sphi 0, %s148
      %s166 = sphi 0, %s166
      %s168 = sphi 0, %s166
      %s169 = sphi 0, %s168
      %s183 = sphi 0, %s169
      %s187 = sphi 0, %s187
      %s189 = sphi 0, %s187
      %s190 = sphi 0, %s189
      %s204 = sphi 0, %s190
      %s210 = sphi 0, %s212
      %s213 = sphi 0, %s210
      %s214 = sphi 0, %s213
      %s230 = sphi 0, %s214
    $region4: #{tpu_custom_call.1} parent=1 // loop_header_branch
      %20 = sbr.rel (%p18) target = $region8
    $region5: #{tpu_custom_call.1} parent=1 // loop_body
      %s22 = ssub.s32 %s17, 1
      %s23 = ssub.s32 %s17, 2
      %s24 = sadd.s32 %s17, 1
      %s25 = ssub.s32 %s17, %s24
      %p26 = scmp.eq.s32.totalorder %s25, 0
      %s28 = sadd.s32 %s27, 1
      %s29 = scalar_select %p26, %s27, %s28
      %p32 = pneg %p26
      %p33 = scmp.eq.s32.totalorder %s17, 1
      %p34 = por %p32, %p33
      %p35 = scmp.ne.s32.totalorder %s27, %s30
      %p36 = scmp.eq.s32.totalorder %s17, 0
      %p37 = por %p35, %p36
      %p38 = scmp.ne.s32.totalorder %s27, %s30
      %p39 = scmp.eq.s32.totalorder %s22, 1
      %p40 = por %p38, %p39
      %p41 = scmp.ne.s32.totalorder %s30, %s31
      %p42 = scmp.eq.s32.totalorder %s22, 0
      %p43 = por %p41, %p42
      %p44 = scmp.ne.s32.totalorder %s30, %s31
      %p45 = scmp.eq.s32.totalorder %s23, 1
      %p46 = por %p44, %p45
      %p48 = scmp.ne.s32.totalorder %s31, %s47
      %p49 = scmp.eq.s32.totalorder %s23, 0
      %p50 = por %p48, %p49
      %s51 = ssub.s32 %s17, %s24
      %p52 = scmp.eq.s32.totalorder %s51, 0
      %s54 = sadd.s32 %s53, 1
      %s55 = scalar_select %p52, %s53, %s54
      %p58 = pneg %p52
      %p59 = scmp.eq.s32.totalorder %s17, 1
      %p60 = por %p58, %p59
      %p61 = scmp.ne.s32.totalorder %s53, %s56
      %p62 = scmp.eq.s32.totalorder %s17, 0
      %p63 = por %p61, %p62
      %p64 = scmp.ne.s32.totalorder %s53, %s56
      %p65 = scmp.eq.s32.totalorder %s22, 1
      %p66 = por %p64, %p65
      %p67 = scmp.ne.s32.totalorder %s56, %s57
      %p68 = scmp.eq.s32.totalorder %s22, 0
      %p69 = por %p67, %p68
      %p70 = scmp.ne.s32.totalorder %s56, %s57
      %p71 = scmp.eq.s32.totalorder %s23, 1
      %p72 = por %p70, %p71
      %p74 = scmp.ne.s32.totalorder %s57, %s73
      %p75 = scmp.eq.s32.totalorder %s23, 0
      %p76 = por %p74, %p75
      %s77 = ssub.s32 %s17, %s24
      %p78 = scmp.eq.s32.totalorder %s77, 0
      %s80 = sadd.s32 %s79, 1
      %s81 = scalar_select %p78, %s79, %s80
      %p84 = pneg %p78
      %p85 = scmp.eq.s32.totalorder %s17, 1
      %p86 = por %p84, %p85
      %p87 = scmp.ne.s32.totalorder %s79, %s82
      %p88 = scmp.eq.s32.totalorder %s17, 0
      %p89 = por %p87, %p88
      %p90 = scmp.ne.s32.totalorder %s79, %s82
      %p91 = scmp.eq.s32.totalorder %s22, 1
      %p92 = por %p90, %p91
      %p93 = scmp.ne.s32.totalorder %s82, %s83
      %p94 = scmp.eq.s32.totalorder %s22, 0
      %p95 = por %p93, %p94
      %p96 = scmp.ne.s32.totalorder %s82, %s83
      %p97 = scmp.eq.s32.totalorder %s23, 1
      %p98 = por %p96, %p97
      %p100 = scmp.ne.s32.totalorder %s83, %s99
      %p101 = scmp.eq.s32.totalorder %s23, 0
      %p102 = por %p100, %p101
      %s104 = sadd.s32 %s103, 1
      %p107 = scmp.eq.s32.totalorder %s17, 1
      %p108 = scmp.ne.s32.totalorder %s103, %s105
      %p109 = scmp.eq.s32.totalorder %s17, 0
      %p110 = por %p108, %p109
      %p111 = scmp.ne.s32.totalorder %s103, %s105
      %p112 = scmp.eq.s32.totalorder %s22, 1
      %p113 = por %p111, %p112
      %p114 = scmp.ne.s32.totalorder %s105, %s106
      %p115 = scmp.eq.s32.totalorder %s22, 0
      %p116 = por %p114, %p115
      %p117 = scmp.ne.s32.totalorder %s105, %s106
      %p118 = scmp.eq.s32.totalorder %s23, 1
      %p119 = por %p117, %p118
      %p121 = scmp.ne.s32.totalorder %s106, %s120
      %p122 = scmp.eq.s32.totalorder %s23, 0
      %p123 = por %p121, %p122
      %s125 = sadd.s32 %s124, 1
      %p128 = scmp.eq.s32.totalorder %s17, 1
      %p129 = scmp.ne.s32.totalorder %s124, %s126
      %p130 = scmp.eq.s32.totalorder %s17, 0
      %p131 = por %p129, %p130
      %p132 = scmp.ne.s32.totalorder %s124, %s126
      %p133 = scmp.eq.s32.totalorder %s22, 1
      %p134 = por %p132, %p133
      %p135 = scmp.ne.s32.totalorder %s126, %s127
      %p136 = scmp.eq.s32.totalorder %s22, 0
      %p137 = por %p135, %p136
      %p138 = scmp.ne.s32.totalorder %s126, %s127
      %p139 = scmp.eq.s32.totalorder %s23, 1
      %p140 = por %p138, %p139
      %p142 = scmp.ne.s32.totalorder %s127, %s141
      %p143 = scmp.eq.s32.totalorder %s23, 0
      %p144 = por %p142, %p143
      %s146 = sadd.s32 %s145, 1
      %p149 = scmp.eq.s32.totalorder %s17, 1
      %p150 = scmp.ne.s32.totalorder %s145, %s147
      %p151 = scmp.eq.s32.totalorder %s17, 0
      %p152 = por %p150, %p151
      %p153 = scmp.ne.s32.totalorder %s145, %s147
      %p154 = scmp.eq.s32.totalorder %s22, 1
      %p155 = por %p153, %p154
      %p156 = scmp.ne.s32.totalorder %s147, %s148
      %p157 = scmp.eq.s32.totalorder %s22, 0
      %p158 = por %p156, %p157
      %p159 = scmp.ne.s32.totalorder %s147, %s148
      %p160 = scmp.eq.s32.totalorder %s23, 1
      %p161 = por %p159, %p160
      %p163 = scmp.ne.s32.totalorder %s148, %s162
      %p164 = scmp.eq.s32.totalorder %s23, 0
      %p165 = por %p163, %p164
      %s167 = sadd.s32 %s166, 1
      %p170 = scmp.eq.s32.totalorder %s17, 1
      %p171 = scmp.ne.s32.totalorder %s166, %s168
      %p172 = scmp.eq.s32.totalorder %s17, 0
      %p173 = por %p171, %p172
      %p174 = scmp.ne.s32.totalorder %s166, %s168
      %p175 = scmp.eq.s32.totalorder %s22, 1
      %p176 = por %p174, %p175
      %p177 = scmp.ne.s32.totalorder %s168, %s169
      %p178 = scmp.eq.s32.totalorder %s22, 0
      %p179 = por %p177, %p178
      %p180 = scmp.ne.s32.totalorder %s168, %s169
      %p181 = scmp.eq.s32.totalorder %s23, 1
      %p182 = por %p180, %p181
      %p184 = scmp.ne.s32.totalorder %s169, %s183
      %p185 = scmp.eq.s32.totalorder %s23, 0
      %p186 = por %p184, %p185
      %s188 = sadd.s32 %s187, 1
      %p191 = scmp.eq.s32.totalorder %s17, 1
      %p192 = scmp.ne.s32.totalorder %s187, %s189
      %p193 = scmp.eq.s32.totalorder %s17, 0
      %p194 = por %p192, %p193
      %p195 = scmp.ne.s32.totalorder %s187, %s189
      %p196 = scmp.eq.s32.totalorder %s22, 1
      %p197 = por %p195, %p196
      %p198 = scmp.ne.s32.totalorder %s189, %s190
      %p199 = scmp.eq.s32.totalorder %s22, 0
      %p200 = por %p198, %p199
      %p201 = scmp.ne.s32.totalorder %s189, %s190
      %p202 = scmp.eq.s32.totalorder %s23, 1
      %p203 = por %p201, %p202
      %p205 = scmp.ne.s32.totalorder %s190, %s204
      %p206 = scmp.eq.s32.totalorder %s23, 0
      %p207 = por %p205, %p206
      %s208 = ssub.s32 %s17, %s24
      %p209 = scmp.eq.s32.totalorder %s208, 0
      %s211 = sadd.s32 %s210, 1
      %s212 = scalar_select %p209, %s210, %s211
      %p215 = pneg %p209
      %p216 = scmp.eq.s32.totalorder %s17, 1
      %p217 = por %p215, %p216
      %p218 = scmp.ne.s32.totalorder %s210, %s213
      %p219 = scmp.eq.s32.totalorder %s17, 0
      %p220 = por %p218, %p219
      %p221 = scmp.ne.s32.totalorder %s210, %s213
      %p222 = scmp.eq.s32.totalorder %s22, 1
      %p223 = por %p221, %p222
      %p224 = scmp.ne.s32.totalorder %s213, %s214
      %p225 = scmp.eq.s32.totalorder %s22, 0
      %p226 = por %p224, %p225
      %p227 = scmp.ne.s32.totalorder %s213, %s214
      %p228 = scmp.eq.s32.totalorder %s23, 1
      %p229 = por %p227, %p228
      %p231 = scmp.ne.s32.totalorder %s214, %s230
      %p232 = scmp.eq.s32.totalorder %s23, 0
      %p233 = por %p231, %p232
      %p234 = scmp.le.s32.totalorder 1, %s17
      %p235 = scmp.lt.s32.totalorder %s17, 3
      %p236 = pnand %p234, %p235
      %p237 = pneg %p236
      // Predicated region
      $region9: #{tpu_custom_call.1} parent=5 // pred_check
        _
      $region10: #{tpu_custom_call.1} parent=5 // pred_check_branch
        %239 = sbr.rel (%p236) target = $region12
      $region11: #{tpu_custom_call.1} parent=5 // pred_region
        %s240 = ssub.s32 %s17, 1
        // Predicated region
        $region13: #{tpu_custom_call.1} parent=11 // pred_check
          %p241 = pneg %p116
        $region14: #{tpu_custom_call.1} parent=11 // pred_check_branch
          %243 = sbr.rel (%p241) target = $region16
        $region15: #{tpu_custom_call.1} parent=11 // pred_region
          _
        $region16: #{tpu_custom_call.1} parent=11 // pred_fallthru
          _
        // Predicated region
        $region17: #{tpu_custom_call.1} parent=11 // pred_check
          %p244 = pneg %p137
        $region18: #{tpu_custom_call.1} parent=11 // pred_check_branch
          %246 = sbr.rel (%p244) target = $region20
        $region19: #{tpu_custom_call.1} parent=11 // pred_region
          _
        $region20: #{tpu_custom_call.1} parent=11 // pred_fallthru
          _
        // Predicated region
        $region21: #{tpu_custom_call.1} parent=11 // pred_check
          %p247 = pneg %p158
        $region22: #{tpu_custom_call.1} parent=11 // pred_check_branch
          %249 = sbr.rel (%p247) target = $region24
        $region23: #{tpu_custom_call.1} parent=11 // pred_region
          _
        $region24: #{tpu_custom_call.1} parent=11 // pred_fallthru
          _
        // Predicated region
        $region25: #{tpu_custom_call.1} parent=11 // pred_check
          %p250 = pneg %p179
        $region26: #{tpu_custom_call.1} parent=11 // pred_check_branch
          %252 = sbr.rel (%p250) target = $region28
        $region27: #{tpu_custom_call.1} parent=11 // pred_region
          _
        $region28: #{tpu_custom_call.1} parent=11 // pred_fallthru
          _
        // Predicated region
        $region29: #{tpu_custom_call.1} parent=11 // pred_check
          %p253 = pneg %p200
        $region30: #{tpu_custom_call.1} parent=11 // pred_check_branch
          %255 = sbr.rel (%p253) target = $region32
        $region31: #{tpu_custom_call.1} parent=11 // pred_region
          _
        $region32: #{tpu_custom_call.1} parent=11 // pred_fallthru
          _
      $region12: #{tpu_custom_call.1} parent=5 // pred_fallthru
        _
      %p256 = scmp.lt.s32.totalorder %s17, 2
      // Predicated region
      $region33: #{tpu_custom_call.1} parent=5 // pred_check
        %p257 = pneg %p256
      $region34: #{tpu_custom_call.1} parent=5 // pred_check_branch
        %259 = sbr.rel (%p257) target = $region36
      $region35: #{tpu_custom_call.1} parent=5 // pred_region
        // Predicated region
        $region37: #{tpu_custom_call.1} parent=35 // pred_check
          %p260 = pneg %p37
        $region38: #{tpu_custom_call.1} parent=35 // pred_check_branch
          %262 = sbr.rel (%p260) target = $region40
        $region39: #{tpu_custom_call.1} parent=35 // pred_region
          %p263 = scmp.lt.s32.totalorder %s17, 1
          %s264 = scalar_select %p263, %s17, 1
          %s265 = smul.addr %s264, 2
          %s266 = smul.addr %s265, 4
          %s267 = scalar_lea.vmem %s0, %s266
        $region40: #{tpu_custom_call.1} parent=35 // pred_fallthru
          _
        // Predicated region
        $region41: #{tpu_custom_call.1} parent=35 // pred_check
          %p268 = pneg %p63
        $region42: #{tpu_custom_call.1} parent=35 // pred_check_branch
          %270 = sbr.rel (%p268) target = $region44
        $region43: #{tpu_custom_call.1} parent=35 // pred_region
          %p271 = scmp.lt.s32.totalorder %s17, 1
          %s272 = scalar_select %p271, %s17, 1
          %s273 = smul.addr %s272, 2
          %s274 = scalar_lea.vmem %s1, %s273
        $region44: #{tpu_custom_call.1} parent=35 // pred_fallthru
          _
        // Predicated region
        $region45: #{tpu_custom_call.1} parent=35 // pred_check
          %p275 = pneg %p89
        $region46: #{tpu_custom_call.1} parent=35 // pred_check_branch
          %277 = sbr.rel (%p275) target = $region48
        $region47: #{tpu_custom_call.1} parent=35 // pred_region
          %p278 = scmp.lt.s32.totalorder %s17, 1
          %s279 = scalar_select %p278, %s17, 1
          %s280 = smul.addr %s279, 2
          %s281 = scalar_lea.vmem %s2, %s280
        $region48: #{tpu_custom_call.1} parent=35 // pred_fallthru
          _
      $region36: #{tpu_custom_call.1} parent=5 // pred_fallthru
        _
      %p282 = scmp.le.s32.totalorder 1, %s17
      %p283 = scmp.lt.s32.totalorder %s17, 3
      %p284 = pnand %p282, %p283
      %p285 = pneg %p284
      // Predicated region
      $region49: #{tpu_custom_call.1} parent=5 // pred_check
        _
      $region50: #{tpu_custom_call.1} parent=5 // pred_check_branch
        %287 = sbr.rel (%p284) target = $region52
      $region51: #{tpu_custom_call.1} parent=5 // pred_region
        %s288 = ssub.s32 %s17, 1
        %p289 = scmp.lt.s32.totalorder %s22, 1
        %s290 = scalar_select %p289, %s22, 1
        %s291 = smul.addr %s290, 2
        %s292 = smul.addr %s291, 4
        %s293 = scalar_lea.vmem %s0, %s292
        %p294 = pneg %p43
        %p295 = pneg %p40
        %p296 = scmp.lt.s32.totalorder %s22, 1
        %s297 = scalar_select %p296, %s22, 1
        %s298 = smul.addr %s297, 2
        %s299 = scalar_lea.vmem %s1, %s298
        %p300 = pneg %p69
        %p301 = pneg %p66
        %p302 = scmp.lt.s32.totalorder %s22, 1
        %s303 = scalar_select %p302, %s22, 1
        %s304 = smul.addr %s303, 2
        %s305 = scalar_lea.vmem %s2, %s304
        %p306 = pneg %p95
        %p307 = pneg %p92
        %p308 = pneg %p116
        %p309 = pneg %p113
        %p310 = pneg %p137
        %p311 = pneg %p134
        %p312 = pneg %p158
        %p313 = pneg %p155
        %p314 = pneg %p179
        %p315 = pneg %p176
        %p316 = pneg %p200
        %p317 = pneg %p197
        %p318 = pneg %p226
        %p319 = pneg %p223
        %s320 = sand.u32 %s213, 1
        %s321 = scalar_lea.sflag [#allocation3], %s320
        %s322 = sand.u32 %s213, 1
        %s323 = smul.addr %s322, 8
        %s324 = scalar_lea.vmem [#allocation2], %s323
        %p325 = scmp.lt.s32.totalorder %s22, 1
        %s326 = scalar_select %p325, %s22, 1
        %s327 = smul.addr %s326, 2
        %s328 = smul.addr %s327, 4
        %s329 = scalar_lea.vmem %s0, %s328
        %p330 = scmp.lt.s32.totalorder %s22, 1
        %s331 = scalar_select %p330, %s22, 1
        %s332 = smul.addr %s331, 2
        %s333 = scalar_lea.vmem %s1, %s332
        %p334 = scmp.lt.s32.totalorder %s22, 1
        %s335 = scalar_select %p334, %s22, 1
        %s336 = smul.addr %s335, 2
        %s337 = scalar_lea.vmem %s2, %s336
        %v338 = vld [vmem:[%s329] sm:$0xff]
        %v339 = vld [vmem:[%s333] sm:$0x3]
        %v340 = vld [vmem:[%s337] sm:$0x3]
        %v341 = vld [vmem:[%s7] sm:$0x3]
        %s342 = scalar_lea.vmem %s7, 2
        %v343 = vld [vmem:[%s342] sm:$0x3]
        %s344 = scalar_lea.vmem %s7, 4
        %v345 = vld [vmem:[%s344] sm:$0x3]
        %s346 = scalar_lea.vmem %s7, 6
        %v347 = vld [vmem:[%s346] sm:$0x3]
        %s348 = scalar_lea.vmem %s7, 8
        %v349 = vld [vmem:[%s348] sm:$0x3]
        %s350 = scalar_lea.vmem %s7, 10
        %v351 = vld [vmem:[%s350] sm:$0x3]
        %s352 = scalar_lea.vmem %s7, 12
        %v353 = vld [vmem:[%s352] sm:$0x3]
        %s354 = scalar_lea.vmem %s7, 14
        %v355 = vld [vmem:[%s354] sm:$0x3]
        %s356 = scalar_lea.vmem %s7, 16
        %v357 = vld [vmem:[%s356] sm:$0x3]
        %v358 = vld [vmem:[%s3] sm:$0xff]
        %v359 = vld [vmem:[%s3 + $0x8] sm:$0xff]
        %v360 = vld [vmem:[%s3 + $0x10] sm:$0xff]
        %v361 = vld [vmem:[%s3 + $0x18] sm:$0xff]
        %v362 = vld [vmem:[%s3 + $0x20] sm:$0xff]
        %v363 = vld [vmem:[%s3 + $0x28] sm:$0xff]
        %v364 = vld [vmem:[%s3 + $0x30] sm:$0xff]
        %v365 = vld [vmem:[%s3 + $0x38] sm:$0xff]
        %367 = vset.pattern.permute.xlu0 0
        %368 = vperm.xlu0 %367, %v358
        %v369 = vpop.permute.xlu0 %368
        %372 = vset.pattern.permute.xlu0 0
        %373 = vperm.xlu0 %372, %v359
        %v374 = vpop.permute.xlu0 %373
        %377 = vset.pattern.permute.xlu0 0
        %378 = vperm.xlu0 %377, %v360
        %v379 = vpop.permute.xlu0 %378
        %382 = vset.pattern.permute.xlu0 0
        %383 = vperm.xlu0 %382, %v361
        %v384 = vpop.permute.xlu0 %383
        %387 = vset.pattern.permute.xlu0 0
        %388 = vperm.xlu0 %387, %v362
        %v389 = vpop.permute.xlu0 %388
        %392 = vset.pattern.permute.xlu0 0
        %393 = vperm.xlu0 %392, %v363
        %v394 = vpop.permute.xlu0 %393
        %397 = vset.pattern.permute.xlu0 0
        %398 = vperm.xlu0 %397, %v364
        %v399 = vpop.permute.xlu0 %398
        %402 = vset.pattern.permute.xlu0 0
        %403 = vperm.xlu0 %402, %v365
        %v404 = vpop.permute.xlu0 %403
        %v407 = vlaneseq
        %v408 = vshrl.u32 %v407, 7
        %v409 = vsub.s32 0, %v408
        %v410 = vrot.slane %v339, %v409
        %v411 = vlaneseq
        %v412 = vshrl.u32 %v411, 7
        %v413 = vsub.s32 1, %v412
        %v414 = vrot.slane %v339, %v413
        %v417 = vmul.f32 %v369, %v410
        %v418 = vmul.f32 %v369, %v414
        %v419 = vmul.f32 %v374, %v410
        %v420 = vmul.f32 %v374, %v414
        %v421 = vmul.f32 %v379, %v410
        %v422 = vmul.f32 %v379, %v414
        %v423 = vmul.f32 %v384, %v410
        %v424 = vmul.f32 %v384, %v414
        %v425 = vmul.f32 %v389, %v410
        %v426 = vmul.f32 %v389, %v414
        %v427 = vmul.f32 %v394, %v410
        %v428 = vmul.f32 %v394, %v414
        %v429 = vmul.f32 %v399, %v410
        %v430 = vmul.f32 %v399, %v414
        %v431 = vmul.f32 %v404, %v410
        %v432 = vmul.f32 %v404, %v414
        %433 = vset.pattern.permute.xlu0 1
        %434 = vperm.xlu0 %433, %v358
        %v435 = vpop.permute.xlu0 %434
        %437 = vset.pattern.permute.xlu0 1
        %438 = vperm.xlu0 %437, %v359
        %v439 = vpop.permute.xlu0 %438
        %441 = vset.pattern.permute.xlu0 1
        %442 = vperm.xlu0 %441, %v360
        %v443 = vpop.permute.xlu0 %442
        %445 = vset.pattern.permute.xlu0 1
        %446 = vperm.xlu0 %445, %v361
        %v447 = vpop.permute.xlu0 %446
        %449 = vset.pattern.permute.xlu0 1
        %450 = vperm.xlu0 %449, %v362
        %v451 = vpop.permute.xlu0 %450
        %453 = vset.pattern.permute.xlu0 1
        %454 = vperm.xlu0 %453, %v363
        %v455 = vpop.permute.xlu0 %454
        %457 = vset.pattern.permute.xlu0 1
        %458 = vperm.xlu0 %457, %v364
        %v459 = vpop.permute.xlu0 %458
        %461 = vset.pattern.permute.xlu0 1
        %462 = vperm.xlu0 %461, %v365
        %v463 = vpop.permute.xlu0 %462
        %v466 = vlaneseq
        %v467 = vshrl.u32 %v466, 7
        %v468 = vsub.s32 0, %v467
        %v469 = vrot.slane %v340, %v468
        %v470 = vlaneseq
        %v471 = vshrl.u32 %v470, 7
        %v472 = vsub.s32 1, %v471
        %v473 = vrot.slane %v340, %v472
        %v476 = vmul.f32 %v435, %v469
        %v477 = vmul.f32 %v435, %v473
        %v478 = vmul.f32 %v439, %v469
        %v479 = vmul.f32 %v439, %v473
        %v480 = vmul.f32 %v443, %v469
        %v481 = vmul.f32 %v443, %v473
        %v482 = vmul.f32 %v447, %v469
        %v483 = vmul.f32 %v447, %v473
        %v484 = vmul.f32 %v451, %v469
        %v485 = vmul.f32 %v451, %v473
        %v486 = vmul.f32 %v455, %v469
        %v487 = vmul.f32 %v455, %v473
        %v488 = vmul.f32 %v459, %v469
        %v489 = vmul.f32 %v459, %v473
        %v490 = vmul.f32 %v463, %v469
        %v491 = vmul.f32 %v463, %v473
        %v492 = vadd.f32 %v417, %v476
        %v493 = vadd.f32 %v418, %v477
        %v494 = vadd.f32 %v419, %v478
        %v495 = vadd.f32 %v420, %v479
        %v496 = vadd.f32 %v421, %v480
        %v497 = vadd.f32 %v422, %v481
        %v498 = vadd.f32 %v423, %v482
        %v499 = vadd.f32 %v424, %v483
        %v500 = vadd.f32 %v425, %v484
        %v501 = vadd.f32 %v426, %v485
        %v502 = vadd.f32 %v427, %v486
        %v503 = vadd.f32 %v428, %v487
        %v504 = vadd.f32 %v429, %v488
        %v505 = vadd.f32 %v430, %v489
        %v506 = vadd.f32 %v431, %v490
        %v507 = vadd.f32 %v432, %v491
        %516 = vrot.lane.b32.xlu0 %v493, 17
        %v517 = vpop.permute.xlu0 %516
        %518 = vrot.lane.b32.xlu0 %v495, 17
        %v519 = vpop.permute.xlu0 %518
        %520 = vrot.lane.b32.xlu0 %v497, 17
        %v521 = vpop.permute.xlu0 %520
        %522 = vrot.lane.b32.xlu0 %v499, 17
        %v523 = vpop.permute.xlu0 %522
        %524 = vrot.lane.b32.xlu0 %v501, 17
        %v525 = vpop.permute.xlu0 %524
        %526 = vrot.lane.b32.xlu0 %v503, 17
        %v527 = vpop.permute.xlu0 %526
        %528 = vrot.lane.b32.xlu0 %v505, 17
        %v529 = vpop.permute.xlu0 %528
        %530 = vrot.lane.b32.xlu0 %v507, 17
        %v531 = vpop.permute.xlu0 %530
        %548 = vrot.lane.b32.xlu0 %v492, 17
        %v549 = vpop.permute.xlu0 %548
        %550 = vrot.lane.b32.xlu0 %v494, 17
        %v551 = vpop.permute.xlu0 %550
        %552 = vrot.lane.b32.xlu0 %v496, 17
        %v553 = vpop.permute.xlu0 %552
        %554 = vrot.lane.b32.xlu0 %v498, 17
        %v555 = vpop.permute.xlu0 %554
        %556 = vrot.lane.b32.xlu0 %v500, 17
        %v557 = vpop.permute.xlu0 %556
        %558 = vrot.lane.b32.xlu0 %v502, 17
        %v559 = vpop.permute.xlu0 %558
        %560 = vrot.lane.b32.xlu0 %v504, 17
        %v561 = vpop.permute.xlu0 %560
        %562 = vrot.lane.b32.xlu0 %v506, 17
        %v563 = vpop.permute.xlu0 %562
        %vm564 = vcmask 138240
        %v565 = vsel %vm564, %v549, %v517
        %v566 = vsel %vm564, %v551, %v519
        %v567 = vsel %vm564, %v553, %v521
        %v568 = vsel %vm564, %v555, %v523
        %v569 = vsel %vm564, %v557, %v525
        %v570 = vsel %vm564, %v559, %v527
        %v571 = vsel %vm564, %v561, %v529
        %v572 = vsel %vm564, %v563, %v531
        %v589 = vsel %vm564, %v517, %v549
        %v590 = vsel %vm564, %v519, %v551
        %v591 = vsel %vm564, %v521, %v553
        %v592 = vsel %vm564, %v523, %v555
        %v593 = vsel %vm564, %v525, %v557
        %v594 = vsel %vm564, %v527, %v559
        %v595 = vsel %vm564, %v529, %v561
        %v596 = vsel %vm564, %v531, %v563
        %v598 = vlaneseq
        %v599 = vshrl.u32 %v598, 7
        %v600 = vsub.s32 0, %v599
        %v601 = vrot.slane %v341, %v600
        %v602 = vlaneseq
        %v603 = vshrl.u32 %v602, 7
        %v604 = vsub.s32 1, %v603
        %v605 = vrot.slane %v341, %v604
        %v608 = vmul.f32 %v601, %v589
        %v609 = vmul.f32 %v605, %v565
        %v610 = vmul.f32 %v601, %v590
        %v611 = vmul.f32 %v605, %v566
        %v612 = vmul.f32 %v601, %v591
        %v613 = vmul.f32 %v605, %v567
        %v614 = vmul.f32 %v601, %v592
        %v615 = vmul.f32 %v605, %v568
        %v616 = vmul.f32 %v601, %v593
        %v617 = vmul.f32 %v605, %v569
        %v618 = vmul.f32 %v601, %v594
        %v619 = vmul.f32 %v605, %v570
        %v620 = vmul.f32 %v601, %v595
        %v621 = vmul.f32 %v605, %v571
        %v622 = vmul.f32 %v601, %v596
        %v623 = vmul.f32 %v605, %v572
        %v624 = vadd.f32 %v608, 0.0
        %v625 = vadd.f32 %v609, 0.0
        %v626 = vadd.f32 %v610, 0.0
        %v627 = vadd.f32 %v611, 0.0
        %v628 = vadd.f32 %v612, 0.0
        %v629 = vadd.f32 %v613, 0.0
        %v630 = vadd.f32 %v614, 0.0
        %v631 = vadd.f32 %v615, 0.0
        %v632 = vadd.f32 %v616, 0.0
        %v633 = vadd.f32 %v617, 0.0
        %v634 = vadd.f32 %v618, 0.0
        %v635 = vadd.f32 %v619, 0.0
        %v636 = vadd.f32 %v620, 0.0
        %v637 = vadd.f32 %v621, 0.0
        %v638 = vadd.f32 %v622, 0.0
        %v639 = vadd.f32 %v623, 0.0
        %s640 = scalar_lea.vmem %s3, 64
        %v641 = vld [vmem:[%s640] sm:$0xff]
        %v642 = vld [vmem:[%s640 + $0x8] sm:$0xff]
        %v643 = vld [vmem:[%s640 + $0x10] sm:$0xff]
        %v644 = vld [vmem:[%s640 + $0x18] sm:$0xff]
        %v645 = vld [vmem:[%s640 + $0x20] sm:$0xff]
        %v646 = vld [vmem:[%s640 + $0x28] sm:$0xff]
        %v647 = vld [vmem:[%s640 + $0x30] sm:$0xff]
        %v648 = vld [vmem:[%s640 + $0x38] sm:$0xff]
        %650 = vset.pattern.permute.xlu0 0
        %651 = vperm.xlu0 %650, %v641
        %v652 = vpop.permute.xlu0 %651
        %655 = vset.pattern.permute.xlu0 0
        %656 = vperm.xlu0 %655, %v642
        %v657 = vpop.permute.xlu0 %656
        %660 = vset.pattern.permute.xlu0 0
        %661 = vperm.xlu0 %660, %v643
        %v662 = vpop.permute.xlu0 %661
        %665 = vset.pattern.permute.xlu0 0
        %666 = vperm.xlu0 %665, %v644
        %v667 = vpop.permute.xlu0 %666
        %670 = vset.pattern.permute.xlu0 0
        %671 = vperm.xlu0 %670, %v645
        %v672 = vpop.permute.xlu0 %671
        %675 = vset.pattern.permute.xlu0 0
        %676 = vperm.xlu0 %675, %v646
        %v677 = vpop.permute.xlu0 %676
        %680 = vset.pattern.permute.xlu0 0
        %681 = vperm.xlu0 %680, %v647
        %v682 = vpop.permute.xlu0 %681
        %685 = vset.pattern.permute.xlu0 0
        %686 = vperm.xlu0 %685, %v648
        %v687 = vpop.permute.xlu0 %686
        %v689 = vmul.f32 %v652, %v410
        %v690 = vmul.f32 %v652, %v414
        %v691 = vmul.f32 %v657, %v410
        %v692 = vmul.f32 %v657, %v414
        %v693 = vmul.f32 %v662, %v410
        %v694 = vmul.f32 %v662, %v414
        %v695 = vmul.f32 %v667, %v410
        %v696 = vmul.f32 %v667, %v414
        %v697 = vmul.f32 %v672, %v410
        %v698 = vmul.f32 %v672, %v414
        %v699 = vmul.f32 %v677, %v410
        %v700 = vmul.f32 %v677, %v414
        %v701 = vmul.f32 %v682, %v410
        %v702 = vmul.f32 %v682, %v414
        %v703 = vmul.f32 %v687, %v410
        %v704 = vmul.f32 %v687, %v414
        %705 = vset.pattern.permute.xlu0 1
        %706 = vperm.xlu0 %705, %v641
        %v707 = vpop.permute.xlu0 %706
        %709 = vset.pattern.permute.xlu0 1
        %710 = vperm.xlu0 %709, %v642
        %v711 = vpop.permute.xlu0 %710
        %713 = vset.pattern.permute.xlu0 1
        %714 = vperm.xlu0 %713, %v643
        %v715 = vpop.permute.xlu0 %714
        %717 = vset.pattern.permute.xlu0 1
        %718 = vperm.xlu0 %717, %v644
        %v719 = vpop.permute.xlu0 %718
        %721 = vset.pattern.permute.xlu0 1
        %722 = vperm.xlu0 %721, %v645
        %v723 = vpop.permute.xlu0 %722
        %725 = vset.pattern.permute.xlu0 1
        %726 = vperm.xlu0 %725, %v646
        %v727 = vpop.permute.xlu0 %726
        %729 = vset.pattern.permute.xlu0 1
        %730 = vperm.xlu0 %729, %v647
        %v731 = vpop.permute.xlu0 %730
        %733 = vset.pattern.permute.xlu0 1
        %734 = vperm.xlu0 %733, %v648
        %v735 = vpop.permute.xlu0 %734
        %v737 = vmul.f32 %v707, %v469
        %v738 = vmul.f32 %v707, %v473
        %v739 = vmul.f32 %v711, %v469
        %v740 = vmul.f32 %v711, %v473
        %v741 = vmul.f32 %v715, %v469
        %v742 = vmul.f32 %v715, %v473
        %v743 = vmul.f32 %v719, %v469
        %v744 = vmul.f32 %v719, %v473
        %v745 = vmul.f32 %v723, %v469
        %v746 = vmul.f32 %v723, %v473
        %v747 = vmul.f32 %v727, %v469
        %v748 = vmul.f32 %v727, %v473
        %v749 = vmul.f32 %v731, %v469
        %v750 = vmul.f32 %v731, %v473
        %v751 = vmul.f32 %v735, %v469
        %v752 = vmul.f32 %v735, %v473
        %v753 = vadd.f32 %v689, %v737
        %v754 = vadd.f32 %v690, %v738
        %v755 = vadd.f32 %v691, %v739
        %v756 = vadd.f32 %v692, %v740
        %v757 = vadd.f32 %v693, %v741
        %v758 = vadd.f32 %v694, %v742
        %v759 = vadd.f32 %v695, %v743
        %v760 = vadd.f32 %v696, %v744
        %v761 = vadd.f32 %v697, %v745
        %v762 = vadd.f32 %v698, %v746
        %v763 = vadd.f32 %v699, %v747
        %v764 = vadd.f32 %v700, %v748
        %v765 = vadd.f32 %v701, %v749
        %v766 = vadd.f32 %v702, %v750
        %v767 = vadd.f32 %v703, %v751
        %v768 = vadd.f32 %v704, %v752
        %777 = vrot.lane.b32.xlu0 %v754, 16
        %v778 = vpop.permute.xlu0 %777
        %779 = vrot.lane.b32.xlu0 %v756, 16
        %v780 = vpop.permute.xlu0 %779
        %781 = vrot.lane.b32.xlu0 %v758, 16
        %v782 = vpop.permute.xlu0 %781
        %783 = vrot.lane.b32.xlu0 %v760, 16
        %v784 = vpop.permute.xlu0 %783
        %785 = vrot.lane.b32.xlu0 %v762, 16
        %v786 = vpop.permute.xlu0 %785
        %787 = vrot.lane.b32.xlu0 %v764, 16
        %v788 = vpop.permute.xlu0 %787
        %789 = vrot.lane.b32.xlu0 %v766, 16
        %v790 = vpop.permute.xlu0 %789
        %791 = vrot.lane.b32.xlu0 %v768, 16
        %v792 = vpop.permute.xlu0 %791
        %809 = vrot.lane.b32.xlu0 %v753, 16
        %v810 = vpop.permute.xlu0 %809
        %811 = vrot.lane.b32.xlu0 %v755, 16
        %v812 = vpop.permute.xlu0 %811
        %813 = vrot.lane.b32.xlu0 %v757, 16
        %v814 = vpop.permute.xlu0 %813
        %815 = vrot.lane.b32.xlu0 %v759, 16
        %v816 = vpop.permute.xlu0 %815
        %817 = vrot.lane.b32.xlu0 %v761, 16
        %v818 = vpop.permute.xlu0 %817
        %819 = vrot.lane.b32.xlu0 %v763, 16
        %v820 = vpop.permute.xlu0 %819
        %821 = vrot.lane.b32.xlu0 %v765, 16
        %v822 = vpop.permute.xlu0 %821
        %823 = vrot.lane.b32.xlu0 %v767, 16
        %v824 = vpop.permute.xlu0 %823
        %vm825 = vcmask 130048
        %v826 = vsel %vm825, %v810, %v778
        %v827 = vsel %vm825, %v812, %v780
        %v828 = vsel %vm825, %v814, %v782
        %v829 = vsel %vm825, %v816, %v784
        %v830 = vsel %vm825, %v818, %v786
        %v831 = vsel %vm825, %v820, %v788
        %v832 = vsel %vm825, %v822, %v790
        %v833 = vsel %vm825, %v824, %v792
        %v850 = vsel %vm825, %v778, %v810
        %v851 = vsel %vm825, %v780, %v812
        %v852 = vsel %vm825, %v782, %v814
        %v853 = vsel %vm825, %v784, %v816
        %v854 = vsel %vm825, %v786, %v818
        %v855 = vsel %vm825, %v788, %v820
        %v856 = vsel %vm825, %v790, %v822
        %v857 = vsel %vm825, %v792, %v824
        %v859 = vlaneseq
        %v860 = vshrl.u32 %v859, 7
        %v861 = vsub.s32 0, %v860
        %v862 = vrot.slane %v343, %v861
        %v863 = vlaneseq
        %v864 = vshrl.u32 %v863, 7
        %v865 = vsub.s32 1, %v864
        %v866 = vrot.slane %v343, %v865
        %v869 = vmul.f32 %v862, %v850
        %v870 = vmul.f32 %v866, %v826
        %v871 = vmul.f32 %v862, %v851
        %v872 = vmul.f32 %v866, %v827
        %v873 = vmul.f32 %v862, %v852
        %v874 = vmul.f32 %v866, %v828
        %v875 = vmul.f32 %v862, %v853
        %v876 = vmul.f32 %v866, %v829
        %v877 = vmul.f32 %v862, %v854
        %v878 = vmul.f32 %v866, %v830
        %v879 = vmul.f32 %v862, %v855
        %v880 = vmul.f32 %v866, %v831
        %v881 = vmul.f32 %v862, %v856
        %v882 = vmul.f32 %v866, %v832
        %v883 = vmul.f32 %v862, %v857
        %v884 = vmul.f32 %v866, %v833
        %v885 = vadd.f32 %v624, %v869
        %v886 = vadd.f32 %v625, %v870
        %v887 = vadd.f32 %v626, %v871
        %v888 = vadd.f32 %v627, %v872
        %v889 = vadd.f32 %v628, %v873
        %v890 = vadd.f32 %v629, %v874
        %v891 = vadd.f32 %v630, %v875
        %v892 = vadd.f32 %v631, %v876
        %v893 = vadd.f32 %v632, %v877
        %v894 = vadd.f32 %v633, %v878
        %v895 = vadd.f32 %v634, %v879
        %v896 = vadd.f32 %v635, %v880
        %v897 = vadd.f32 %v636, %v881
        %v898 = vadd.f32 %v637, %v882
        %v899 = vadd.f32 %v638, %v883
        %v900 = vadd.f32 %v639, %v884
        %s901 = scalar_lea.vmem %s3, 128
        %v902 = vld [vmem:[%s901] sm:$0xff]
        %v903 = vld [vmem:[%s901 + $0x8] sm:$0xff]
        %v904 = vld [vmem:[%s901 + $0x10] sm:$0xff]
        %v905 = vld [vmem:[%s901 + $0x18] sm:$0xff]
        %v906 = vld [vmem:[%s901 + $0x20] sm:$0xff]
        %v907 = vld [vmem:[%s901 + $0x28] sm:$0xff]
        %v908 = vld [vmem:[%s901 + $0x30] sm:$0xff]
        %v909 = vld [vmem:[%s901 + $0x38] sm:$0xff]
        %911 = vset.pattern.permute.xlu0 0
        %912 = vperm.xlu0 %911, %v902
        %v913 = vpop.permute.xlu0 %912
        %916 = vset.pattern.permute.xlu0 0
        %917 = vperm.xlu0 %916, %v903
        %v918 = vpop.permute.xlu0 %917
        %921 = vset.pattern.permute.xlu0 0
        %922 = vperm.xlu0 %921, %v904
        %v923 = vpop.permute.xlu0 %922
        %926 = vset.pattern.permute.xlu0 0
        %927 = vperm.xlu0 %926, %v905
        %v928 = vpop.permute.xlu0 %927
        %931 = vset.pattern.permute.xlu0 0
        %932 = vperm.xlu0 %931, %v906
        %v933 = vpop.permute.xlu0 %932
        %936 = vset.pattern.permute.xlu0 0
        %937 = vperm.xlu0 %936, %v907
        %v938 = vpop.permute.xlu0 %937
        %941 = vset.pattern.permute.xlu0 0
        %942 = vperm.xlu0 %941, %v908
        %v943 = vpop.permute.xlu0 %942
        %946 = vset.pattern.permute.xlu0 0
        %947 = vperm.xlu0 %946, %v909
        %v948 = vpop.permute.xlu0 %947
        %v950 = vmul.f32 %v913, %v410
        %v951 = vmul.f32 %v913, %v414
        %v952 = vmul.f32 %v918, %v410
        %v953 = vmul.f32 %v918, %v414
        %v954 = vmul.f32 %v923, %v410
        %v955 = vmul.f32 %v923, %v414
        %v956 = vmul.f32 %v928, %v410
        %v957 = vmul.f32 %v928, %v414
        %v958 = vmul.f32 %v933, %v410
        %v959 = vmul.f32 %v933, %v414
        %v960 = vmul.f32 %v938, %v410
        %v961 = vmul.f32 %v938, %v414
        %v962 = vmul.f32 %v943, %v410
        %v963 = vmul.f32 %v943, %v414
        %v964 = vmul.f32 %v948, %v410
        %v965 = vmul.f32 %v948, %v414
        %966 = vset.pattern.permute.xlu0 1
        %967 = vperm.xlu0 %966, %v902
        %v968 = vpop.permute.xlu0 %967
        %970 = vset.pattern.permute.xlu0 1
        %971 = vperm.xlu0 %970, %v903
        %v972 = vpop.permute.xlu0 %971
        %974 = vset.pattern.permute.xlu0 1
        %975 = vperm.xlu0 %974, %v904
        %v976 = vpop.permute.xlu0 %975
        %978 = vset.pattern.permute.xlu0 1
        %979 = vperm.xlu0 %978, %v905
        %v980 = vpop.permute.xlu0 %979
        %982 = vset.pattern.permute.xlu0 1
        %983 = vperm.xlu0 %982, %v906
        %v984 = vpop.permute.xlu0 %983
        %986 = vset.pattern.permute.xlu0 1
        %987 = vperm.xlu0 %986, %v907
        %v988 = vpop.permute.xlu0 %987
        %990 = vset.pattern.permute.xlu0 1
        %991 = vperm.xlu0 %990, %v908
        %v992 = vpop.permute.xlu0 %991
        %994 = vset.pattern.permute.xlu0 1
        %995 = vperm.xlu0 %994, %v909
        %v996 = vpop.permute.xlu0 %995
        %v998 = vmul.f32 %v968, %v469
        %v999 = vmul.f32 %v968, %v473
        %v1000 = vmul.f32 %v972, %v469
        %v1001 = vmul.f32 %v972, %v473
        %v1002 = vmul.f32 %v976, %v469
        %v1003 = vmul.f32 %v976, %v473
        %v1004 = vmul.f32 %v980, %v469
        %v1005 = vmul.f32 %v980, %v473
        %v1006 = vmul.f32 %v984, %v469
        %v1007 = vmul.f32 %v984, %v473
        %v1008 = vmul.f32 %v988, %v469
        %v1009 = vmul.f32 %v988, %v473
        %v1010 = vmul.f32 %v992, %v469
        %v1011 = vmul.f32 %v992, %v473
        %v1012 = vmul.f32 %v996, %v469
        %v1013 = vmul.f32 %v996, %v473
        %v1014 = vadd.f32 %v950, %v998
        %v1015 = vadd.f32 %v951, %v999
        %v1016 = vadd.f32 %v952, %v1000
        %v1017 = vadd.f32 %v953, %v1001
        %v1018 = vadd.f32 %v954, %v1002
        %v1019 = vadd.f32 %v955, %v1003
        %v1020 = vadd.f32 %v956, %v1004
        %v1021 = vadd.f32 %v957, %v1005
        %v1022 = vadd.f32 %v958, %v1006
        %v1023 = vadd.f32 %v959, %v1007
        %v1024 = vadd.f32 %v960, %v1008
        %v1025 = vadd.f32 %v961, %v1009
        %v1026 = vadd.f32 %v962, %v1010
        %v1027 = vadd.f32 %v963, %v1011
        %v1028 = vadd.f32 %v964, %v1012
        %v1029 = vadd.f32 %v965, %v1013
        %1038 = vrot.lane.b32.xlu0 %v1015, 15
        %v1039 = vpop.permute.xlu0 %1038
        %1040 = vrot.lane.b32.xlu0 %v1017, 15
        %v1041 = vpop.permute.xlu0 %1040
        %1042 = vrot.lane.b32.xlu0 %v1019, 15
        %v1043 = vpop.permute.xlu0 %1042
        %1044 = vrot.lane.b32.xlu0 %v1021, 15
        %v1045 = vpop.permute.xlu0 %1044
        %1046 = vrot.lane.b32.xlu0 %v1023, 15
        %v1047 = vpop.permute.xlu0 %1046
        %1048 = vrot.lane.b32.xlu0 %v1025, 15
        %v1049 = vpop.permute.xlu0 %1048
        %1050 = vrot.lane.b32.xlu0 %v1027, 15
        %v1051 = vpop.permute.xlu0 %1050
        %1052 = vrot.lane.b32.xlu0 %v1029, 15
        %v1053 = vpop.permute.xlu0 %1052
        %1070 = vrot.lane.b32.xlu0 %v1014, 15
        %v1071 = vpop.permute.xlu0 %1070
        %1072 = vrot.lane.b32.xlu0 %v1016, 15
        %v1073 = vpop.permute.xlu0 %1072
        %1074 = vrot.lane.b32.xlu0 %v1018, 15
        %v1075 = vpop.permute.xlu0 %1074
        %1076 = vrot.lane.b32.xlu0 %v1020, 15
        %v1077 = vpop.permute.xlu0 %1076
        %1078 = vrot.lane.b32.xlu0 %v1022, 15
        %v1079 = vpop.permute.xlu0 %1078
        %1080 = vrot.lane.b32.xlu0 %v1024, 15
        %v1081 = vpop.permute.xlu0 %1080
        %1082 = vrot.lane.b32.xlu0 %v1026, 15
        %v1083 = vpop.permute.xlu0 %1082
        %1084 = vrot.lane.b32.xlu0 %v1028, 15
        %v1085 = vpop.permute.xlu0 %1084
        %vm1086 = vcmask 121856
        %v1087 = vsel %vm1086, %v1071, %v1039
        %v1088 = vsel %vm1086, %v1073, %v1041
        %v1089 = vsel %vm1086, %v1075, %v1043
        %v1090 = vsel %vm1086, %v1077, %v1045
        %v1091 = vsel %vm1086, %v1079, %v1047
        %v1092 = vsel %vm1086, %v1081, %v1049
        %v1093 = vsel %vm1086, %v1083, %v1051
        %v1094 = vsel %vm1086, %v1085, %v1053
        %v1111 = vsel %vm1086, %v1039, %v1071
        %v1112 = vsel %vm1086, %v1041, %v1073
        %v1113 = vsel %vm1086, %v1043, %v1075
        %v1114 = vsel %vm1086, %v1045, %v1077
        %v1115 = vsel %vm1086, %v1047, %v1079
        %v1116 = vsel %vm1086, %v1049, %v1081
        %v1117 = vsel %vm1086, %v1051, %v1083
        %v1118 = vsel %vm1086, %v1053, %v1085
        %v1120 = vlaneseq
        %v1121 = vshrl.u32 %v1120, 7
        %v1122 = vsub.s32 0, %v1121
        %v1123 = vrot.slane %v345, %v1122
        %v1124 = vlaneseq
        %v1125 = vshrl.u32 %v1124, 7
        %v1126 = vsub.s32 1, %v1125
        %v1127 = vrot.slane %v345, %v1126
        %v1130 = vmul.f32 %v1123, %v1111
        %v1131 = vmul.f32 %v1127, %v1087
        %v1132 = vmul.f32 %v1123, %v1112
        %v1133 = vmul.f32 %v1127, %v1088
        %v1134 = vmul.f32 %v1123, %v1113
        %v1135 = vmul.f32 %v1127, %v1089
        %v1136 = vmul.f32 %v1123, %v1114
        %v1137 = vmul.f32 %v1127, %v1090
        %v1138 = vmul.f32 %v1123, %v1115
        %v1139 = vmul.f32 %v1127, %v1091
        %v1140 = vmul.f32 %v1123, %v1116
        %v1141 = vmul.f32 %v1127, %v1092
        %v1142 = vmul.f32 %v1123, %v1117
        %v1143 = vmul.f32 %v1127, %v1093
        %v1144 = vmul.f32 %v1123, %v1118
        %v1145 = vmul.f32 %v1127, %v1094
        %v1146 = vadd.f32 %v885, %v1130
        %v1147 = vadd.f32 %v886, %v1131
        %v1148 = vadd.f32 %v887, %v1132
        %v1149 = vadd.f32 %v888, %v1133
        %v1150 = vadd.f32 %v889, %v1134
        %v1151 = vadd.f32 %v890, %v1135
        %v1152 = vadd.f32 %v891, %v1136
        %v1153 = vadd.f32 %v892, %v1137
        %v1154 = vadd.f32 %v893, %v1138
        %v1155 = vadd.f32 %v894, %v1139
        %v1156 = vadd.f32 %v895, %v1140
        %v1157 = vadd.f32 %v896, %v1141
        %v1158 = vadd.f32 %v897, %v1142
        %v1159 = vadd.f32 %v898, %v1143
        %v1160 = vadd.f32 %v899, %v1144
        %v1161 = vadd.f32 %v900, %v1145
        %s1162 = scalar_lea.vmem %s3, 192
        %v1163 = vld [vmem:[%s1162] sm:$0xff]
        %v1164 = vld [vmem:[%s1162 + $0x8] sm:$0xff]
        %v1165 = vld [vmem:[%s1162 + $0x10] sm:$0xff]
        %v1166 = vld [vmem:[%s1162 + $0x18] sm:$0xff]
        %v1167 = vld [vmem:[%s1162 + $0x20] sm:$0xff]
        %v1168 = vld [vmem:[%s1162 + $0x28] sm:$0xff]
        %v1169 = vld [vmem:[%s1162 + $0x30] sm:$0xff]
        %v1170 = vld [vmem:[%s1162 + $0x38] sm:$0xff]
        %1172 = vset.pattern.permute.xlu0 0
        %1173 = vperm.xlu0 %1172, %v1163
        %v1174 = vpop.permute.xlu0 %1173
        %1177 = vset.pattern.permute.xlu0 0
        %1178 = vperm.xlu0 %1177, %v1164
        %v1179 = vpop.permute.xlu0 %1178
        %1182 = vset.pattern.permute.xlu0 0
        %1183 = vperm.xlu0 %1182, %v1165
        %v1184 = vpop.permute.xlu0 %1183
        %1187 = vset.pattern.permute.xlu0 0
        %1188 = vperm.xlu0 %1187, %v1166
        %v1189 = vpop.permute.xlu0 %1188
        %1192 = vset.pattern.permute.xlu0 0
        %1193 = vperm.xlu0 %1192, %v1167
        %v1194 = vpop.permute.xlu0 %1193
        %1197 = vset.pattern.permute.xlu0 0
        %1198 = vperm.xlu0 %1197, %v1168
        %v1199 = vpop.permute.xlu0 %1198
        %1202 = vset.pattern.permute.xlu0 0
        %1203 = vperm.xlu0 %1202, %v1169
        %v1204 = vpop.permute.xlu0 %1203
        %1207 = vset.pattern.permute.xlu0 0
        %1208 = vperm.xlu0 %1207, %v1170
        %v1209 = vpop.permute.xlu0 %1208
        %v1211 = vmul.f32 %v1174, %v410
        %v1212 = vmul.f32 %v1174, %v414
        %v1213 = vmul.f32 %v1179, %v410
        %v1214 = vmul.f32 %v1179, %v414
        %v1215 = vmul.f32 %v1184, %v410
        %v1216 = vmul.f32 %v1184, %v414
        %v1217 = vmul.f32 %v1189, %v410
        %v1218 = vmul.f32 %v1189, %v414
        %v1219 = vmul.f32 %v1194, %v410
        %v1220 = vmul.f32 %v1194, %v414
        %v1221 = vmul.f32 %v1199, %v410
        %v1222 = vmul.f32 %v1199, %v414
        %v1223 = vmul.f32 %v1204, %v410
        %v1224 = vmul.f32 %v1204, %v414
        %v1225 = vmul.f32 %v1209, %v410
        %v1226 = vmul.f32 %v1209, %v414
        %1227 = vset.pattern.permute.xlu0 1
        %1228 = vperm.xlu0 %1227, %v1163
        %v1229 = vpop.permute.xlu0 %1228
        %1231 = vset.pattern.permute.xlu0 1
        %1232 = vperm.xlu0 %1231, %v1164
        %v1233 = vpop.permute.xlu0 %1232
        %1235 = vset.pattern.permute.xlu0 1
        %1236 = vperm.xlu0 %1235, %v1165
        %v1237 = vpop.permute.xlu0 %1236
        %1239 = vset.pattern.permute.xlu0 1
        %1240 = vperm.xlu0 %1239, %v1166
        %v1241 = vpop.permute.xlu0 %1240
        %1243 = vset.pattern.permute.xlu0 1
        %1244 = vperm.xlu0 %1243, %v1167
        %v1245 = vpop.permute.xlu0 %1244
        %1247 = vset.pattern.permute.xlu0 1
        %1248 = vperm.xlu0 %1247, %v1168
        %v1249 = vpop.permute.xlu0 %1248
        %1251 = vset.pattern.permute.xlu0 1
        %1252 = vperm.xlu0 %1251, %v1169
        %v1253 = vpop.permute.xlu0 %1252
        %1255 = vset.pattern.permute.xlu0 1
        %1256 = vperm.xlu0 %1255, %v1170
        %v1257 = vpop.permute.xlu0 %1256
        %v1259 = vmul.f32 %v1229, %v469
        %v1260 = vmul.f32 %v1229, %v473
        %v1261 = vmul.f32 %v1233, %v469
        %v1262 = vmul.f32 %v1233, %v473
        %v1263 = vmul.f32 %v1237, %v469
        %v1264 = vmul.f32 %v1237, %v473
        %v1265 = vmul.f32 %v1241, %v469
        %v1266 = vmul.f32 %v1241, %v473
        %v1267 = vmul.f32 %v1245, %v469
        %v1268 = vmul.f32 %v1245, %v473
        %v1269 = vmul.f32 %v1249, %v469
        %v1270 = vmul.f32 %v1249, %v473
        %v1271 = vmul.f32 %v1253, %v469
        %v1272 = vmul.f32 %v1253, %v473
        %v1273 = vmul.f32 %v1257, %v469
        %v1274 = vmul.f32 %v1257, %v473
        %v1275 = vadd.f32 %v1211, %v1259
        %v1276 = vadd.f32 %v1212, %v1260
        %v1277 = vadd.f32 %v1213, %v1261
        %v1278 = vadd.f32 %v1214, %v1262
        %v1279 = vadd.f32 %v1215, %v1263
        %v1280 = vadd.f32 %v1216, %v1264
        %v1281 = vadd.f32 %v1217, %v1265
        %v1282 = vadd.f32 %v1218, %v1266
        %v1283 = vadd.f32 %v1219, %v1267
        %v1284 = vadd.f32 %v1220, %v1268
        %v1285 = vadd.f32 %v1221, %v1269
        %v1286 = vadd.f32 %v1222, %v1270
        %v1287 = vadd.f32 %v1223, %v1271
        %v1288 = vadd.f32 %v1224, %v1272
        %v1289 = vadd.f32 %v1225, %v1273
        %v1290 = vadd.f32 %v1226, %v1274
        %1299 = vrot.lane.b32.xlu0 %v1276, 1
        %v1300 = vpop.permute.xlu0 %1299
        %1301 = vrot.lane.b32.xlu0 %v1278, 1
        %v1302 = vpop.permute.xlu0 %1301
        %1303 = vrot.lane.b32.xlu0 %v1280, 1
        %v1304 = vpop.permute.xlu0 %1303
        %1305 = vrot.lane.b32.xlu0 %v1282, 1
        %v1306 = vpop.permute.xlu0 %1305
        %1307 = vrot.lane.b32.xlu0 %v1284, 1
        %v1308 = vpop.permute.xlu0 %1307
        %1309 = vrot.lane.b32.xlu0 %v1286, 1
        %v1310 = vpop.permute.xlu0 %1309
        %1311 = vrot.lane.b32.xlu0 %v1288, 1
        %v1312 = vpop.permute.xlu0 %1311
        %1313 = vrot.lane.b32.xlu0 %v1290, 1
        %v1314 = vpop.permute.xlu0 %1313
        %1331 = vrot.lane.b32.xlu0 %v1275, 1
        %v1332 = vpop.permute.xlu0 %1331
        %1333 = vrot.lane.b32.xlu0 %v1277, 1
        %v1334 = vpop.permute.xlu0 %1333
        %1335 = vrot.lane.b32.xlu0 %v1279, 1
        %v1336 = vpop.permute.xlu0 %1335
        %1337 = vrot.lane.b32.xlu0 %v1281, 1
        %v1338 = vpop.permute.xlu0 %1337
        %1339 = vrot.lane.b32.xlu0 %v1283, 1
        %v1340 = vpop.permute.xlu0 %1339
        %1341 = vrot.lane.b32.xlu0 %v1285, 1
        %v1342 = vpop.permute.xlu0 %1341
        %1343 = vrot.lane.b32.xlu0 %v1287, 1
        %v1344 = vpop.permute.xlu0 %1343
        %1345 = vrot.lane.b32.xlu0 %v1289, 1
        %v1346 = vpop.permute.xlu0 %1345
        %vm1347 = vcmask 7168
        %v1348 = vsel %vm1347, %v1332, %v1300
        %v1349 = vsel %vm1347, %v1334, %v1302
        %v1350 = vsel %vm1347, %v1336, %v1304
        %v1351 = vsel %vm1347, %v1338, %v1306
        %v1352 = vsel %vm1347, %v1340, %v1308
        %v1353 = vsel %vm1347, %v1342, %v1310
        %v1354 = vsel %vm1347, %v1344, %v1312
        %v1355 = vsel %vm1347, %v1346, %v1314
        %v1372 = vsel %vm1347, %v1300, %v1332
        %v1373 = vsel %vm1347, %v1302, %v1334
        %v1374 = vsel %vm1347, %v1304, %v1336
        %v1375 = vsel %vm1347, %v1306, %v1338
        %v1376 = vsel %vm1347, %v1308, %v1340
        %v1377 = vsel %vm1347, %v1310, %v1342
        %v1378 = vsel %vm1347, %v1312, %v1344
        %v1379 = vsel %vm1347, %v1314, %v1346
        %v1381 = vlaneseq
        %v1382 = vshrl.u32 %v1381, 7
        %v1383 = vsub.s32 0, %v1382
        %v1384 = vrot.slane %v347, %v1383
        %v1385 = vlaneseq
        %v1386 = vshrl.u32 %v1385, 7
        %v1387 = vsub.s32 1, %v1386
        %v1388 = vrot.slane %v347, %v1387
        %v1391 = vmul.f32 %v1384, %v1372
        %v1392 = vmul.f32 %v1388, %v1348
        %v1393 = vmul.f32 %v1384, %v1373
        %v1394 = vmul.f32 %v1388, %v1349
        %v1395 = vmul.f32 %v1384, %v1374
        %v1396 = vmul.f32 %v1388, %v1350
        %v1397 = vmul.f32 %v1384, %v1375
        %v1398 = vmul.f32 %v1388, %v1351
        %v1399 = vmul.f32 %v1384, %v1376
        %v1400 = vmul.f32 %v1388, %v1352
        %v1401 = vmul.f32 %v1384, %v1377
        %v1402 = vmul.f32 %v1388, %v1353
        %v1403 = vmul.f32 %v1384, %v1378
        %v1404 = vmul.f32 %v1388, %v1354
        %v1405 = vmul.f32 %v1384, %v1379
        %v1406 = vmul.f32 %v1388, %v1355
        %v1407 = vadd.f32 %v1146, %v1391
        %v1408 = vadd.f32 %v1147, %v1392
        %v1409 = vadd.f32 %v1148, %v1393
        %v1410 = vadd.f32 %v1149, %v1394
        %v1411 = vadd.f32 %v1150, %v1395
        %v1412 = vadd.f32 %v1151, %v1396
        %v1413 = vadd.f32 %v1152, %v1397
        %v1414 = vadd.f32 %v1153, %v1398
        %v1415 = vadd.f32 %v1154, %v1399
        %v1416 = vadd.f32 %v1155, %v1400
        %v1417 = vadd.f32 %v1156, %v1401
        %v1418 = vadd.f32 %v1157, %v1402
        %v1419 = vadd.f32 %v1158, %v1403
        %v1420 = vadd.f32 %v1159, %v1404
        %v1421 = vadd.f32 %v1160, %v1405
        %v1422 = vadd.f32 %v1161, %v1406
        %s1423 = scalar_lea.vmem %s3, 256
        %v1424 = vld [vmem:[%s1423] sm:$0xff]
        %v1425 = vld [vmem:[%s1423 + $0x8] sm:$0xff]
        %v1426 = vld [vmem:[%s1423 + $0x10] sm:$0xff]
        %v1427 = vld [vmem:[%s1423 + $0x18] sm:$0xff]
        %v1428 = vld [vmem:[%s1423 + $0x20] sm:$0xff]
        %v1429 = vld [vmem:[%s1423 + $0x28] sm:$0xff]
        %v1430 = vld [vmem:[%s1423 + $0x30] sm:$0xff]
        %v1431 = vld [vmem:[%s1423 + $0x38] sm:$0xff]
        %1433 = vset.pattern.permute.xlu0 0
        %1434 = vperm.xlu0 %1433, %v1424
        %v1435 = vpop.permute.xlu0 %1434
        %1438 = vset.pattern.permute.xlu0 0
        %1439 = vperm.xlu0 %1438, %v1425
        %v1440 = vpop.permute.xlu0 %1439
        %1443 = vset.pattern.permute.xlu0 0
        %1444 = vperm.xlu0 %1443, %v1426
        %v1445 = vpop.permute.xlu0 %1444
        %1448 = vset.pattern.permute.xlu0 0
        %1449 = vperm.xlu0 %1448, %v1427
        %v1450 = vpop.permute.xlu0 %1449
        %1453 = vset.pattern.permute.xlu0 0
        %1454 = vperm.xlu0 %1453, %v1428
        %v1455 = vpop.permute.xlu0 %1454
        %1458 = vset.pattern.permute.xlu0 0
        %1459 = vperm.xlu0 %1458, %v1429
        %v1460 = vpop.permute.xlu0 %1459
        %1463 = vset.pattern.permute.xlu0 0
        %1464 = vperm.xlu0 %1463, %v1430
        %v1465 = vpop.permute.xlu0 %1464
        %1468 = vset.pattern.permute.xlu0 0
        %1469 = vperm.xlu0 %1468, %v1431
        %v1470 = vpop.permute.xlu0 %1469
        %v1472 = vmul.f32 %v1435, %v410
        %v1473 = vmul.f32 %v1435, %v414
        %v1474 = vmul.f32 %v1440, %v410
        %v1475 = vmul.f32 %v1440, %v414
        %v1476 = vmul.f32 %v1445, %v410
        %v1477 = vmul.f32 %v1445, %v414
        %v1478 = vmul.f32 %v1450, %v410
        %v1479 = vmul.f32 %v1450, %v414
        %v1480 = vmul.f32 %v1455, %v410
        %v1481 = vmul.f32 %v1455, %v414
        %v1482 = vmul.f32 %v1460, %v410
        %v1483 = vmul.f32 %v1460, %v414
        %v1484 = vmul.f32 %v1465, %v410
        %v1485 = vmul.f32 %v1465, %v414
        %v1486 = vmul.f32 %v1470, %v410
        %v1487 = vmul.f32 %v1470, %v414
        %1488 = vset.pattern.permute.xlu0 1
        %1489 = vperm.xlu0 %1488, %v1424
        %v1490 = vpop.permute.xlu0 %1489
        %1492 = vset.pattern.permute.xlu0 1
        %1493 = vperm.xlu0 %1492, %v1425
        %v1494 = vpop.permute.xlu0 %1493
        %1496 = vset.pattern.permute.xlu0 1
        %1497 = vperm.xlu0 %1496, %v1426
        %v1498 = vpop.permute.xlu0 %1497
        %1500 = vset.pattern.permute.xlu0 1
        %1501 = vperm.xlu0 %1500, %v1427
        %v1502 = vpop.permute.xlu0 %1501
        %1504 = vset.pattern.permute.xlu0 1
        %1505 = vperm.xlu0 %1504, %v1428
        %v1506 = vpop.permute.xlu0 %1505
        %1508 = vset.pattern.permute.xlu0 1
        %1509 = vperm.xlu0 %1508, %v1429
        %v1510 = vpop.permute.xlu0 %1509
        %1512 = vset.pattern.permute.xlu0 1
        %1513 = vperm.xlu0 %1512, %v1430
        %v1514 = vpop.permute.xlu0 %1513
        %1516 = vset.pattern.permute.xlu0 1
        %1517 = vperm.xlu0 %1516, %v1431
        %v1518 = vpop.permute.xlu0 %1517
        %v1520 = vmul.f32 %v1490, %v469
        %v1521 = vmul.f32 %v1490, %v473
        %v1522 = vmul.f32 %v1494, %v469
        %v1523 = vmul.f32 %v1494, %v473
        %v1524 = vmul.f32 %v1498, %v469
        %v1525 = vmul.f32 %v1498, %v473
        %v1526 = vmul.f32 %v1502, %v469
        %v1527 = vmul.f32 %v1502, %v473
        %v1528 = vmul.f32 %v1506, %v469
        %v1529 = vmul.f32 %v1506, %v473
        %v1530 = vmul.f32 %v1510, %v469
        %v1531 = vmul.f32 %v1510, %v473
        %v1532 = vmul.f32 %v1514, %v469
        %v1533 = vmul.f32 %v1514, %v473
        %v1534 = vmul.f32 %v1518, %v469
        %v1535 = vmul.f32 %v1518, %v473
        %v1536 = vadd.f32 %v1472, %v1520
        %v1537 = vadd.f32 %v1473, %v1521
        %v1538 = vadd.f32 %v1474, %v1522
        %v1539 = vadd.f32 %v1475, %v1523
        %v1540 = vadd.f32 %v1476, %v1524
        %v1541 = vadd.f32 %v1477, %v1525
        %v1542 = vadd.f32 %v1478, %v1526
        %v1543 = vadd.f32 %v1479, %v1527
        %v1544 = vadd.f32 %v1480, %v1528
        %v1545 = vadd.f32 %v1481, %v1529
        %v1546 = vadd.f32 %v1482, %v1530
        %v1547 = vadd.f32 %v1483, %v1531
        %v1548 = vadd.f32 %v1484, %v1532
        %v1549 = vadd.f32 %v1485, %v1533
        %v1550 = vadd.f32 %v1486, %v1534
        %v1551 = vadd.f32 %v1487, %v1535
        %v1553 = vlaneseq
        %v1554 = vshrl.u32 %v1553, 7
        %v1555 = vsub.s32 0, %v1554
        %v1556 = vrot.slane %v349, %v1555
        %v1557 = vlaneseq
        %v1558 = vshrl.u32 %v1557, 7
        %v1559 = vsub.s32 1, %v1558
        %v1560 = vrot.slane %v349, %v1559
        %v1563 = vmul.f32 %v1556, %v1536
        %v1564 = vmul.f32 %v1560, %v1537
        %v1565 = vmul.f32 %v1556, %v1538
        %v1566 = vmul.f32 %v1560, %v1539
        %v1567 = vmul.f32 %v1556, %v1540
        %v1568 = vmul.f32 %v1560, %v1541
        %v1569 = vmul.f32 %v1556, %v1542
        %v1570 = vmul.f32 %v1560, %v1543
        %v1571 = vmul.f32 %v1556, %v1544
        %v1572 = vmul.f32 %v1560, %v1545
        %v1573 = vmul.f32 %v1556, %v1546
        %v1574 = vmul.f32 %v1560, %v1547
        %v1575 = vmul.f32 %v1556, %v1548
        %v1576 = vmul.f32 %v1560, %v1549
        %v1577 = vmul.f32 %v1556, %v1550
        %v1578 = vmul.f32 %v1560, %v1551
        %v1579 = vadd.f32 %v1407, %v1563
        %v1580 = vadd.f32 %v1408, %v1564
        %v1581 = vadd.f32 %v1409, %v1565
        %v1582 = vadd.f32 %v1410, %v1566
        %v1583 = vadd.f32 %v1411, %v1567
        %v1584 = vadd.f32 %v1412, %v1568
        %v1585 = vadd.f32 %v1413, %v1569
        %v1586 = vadd.f32 %v1414, %v1570
        %v1587 = vadd.f32 %v1415, %v1571
        %v1588 = vadd.f32 %v1416, %v1572
        %v1589 = vadd.f32 %v1417, %v1573
        %v1590 = vadd.f32 %v1418, %v1574
        %v1591 = vadd.f32 %v1419, %v1575
        %v1592 = vadd.f32 %v1420, %v1576
        %v1593 = vadd.f32 %v1421, %v1577
        %v1594 = vadd.f32 %v1422, %v1578
        %s1595 = scalar_lea.vmem %s3, 320
        %v1596 = vld [vmem:[%s1595] sm:$0xff]
        %v1597 = vld [vmem:[%s1595 + $0x8] sm:$0xff]
        %v1598 = vld [vmem:[%s1595 + $0x10] sm:$0xff]
        %v1599 = vld [vmem:[%s1595 + $0x18] sm:$0xff]
        %v1600 = vld [vmem:[%s1595 + $0x20] sm:$0xff]
        %v1601 = vld [vmem:[%s1595 + $0x28] sm:$0xff]
        %v1602 = vld [vmem:[%s1595 + $0x30] sm:$0xff]
        %v1603 = vld [vmem:[%s1595 + $0x38] sm:$0xff]
        %1605 = vset.pattern.permute.xlu0 0
        %1606 = vperm.xlu0 %1605, %v1596
        %v1607 = vpop.permute.xlu0 %1606
        %1610 = vset.pattern.permute.xlu0 0
        %1611 = vperm.xlu0 %1610, %v1597
        %v1612 = vpop.permute.xlu0 %1611
        %1615 = vset.pattern.permute.xlu0 0
        %1616 = vperm.xlu0 %1615, %v1598
        %v1617 = vpop.permute.xlu0 %1616
        %1620 = vset.pattern.permute.xlu0 0
        %1621 = vperm.xlu0 %1620, %v1599
        %v1622 = vpop.permute.xlu0 %1621
        %1625 = vset.pattern.permute.xlu0 0
        %1626 = vperm.xlu0 %1625, %v1600
        %v1627 = vpop.permute.xlu0 %1626
        %1630 = vset.pattern.permute.xlu0 0
        %1631 = vperm.xlu0 %1630, %v1601
        %v1632 = vpop.permute.xlu0 %1631
        %1635 = vset.pattern.permute.xlu0 0
        %1636 = vperm.xlu0 %1635, %v1602
        %v1637 = vpop.permute.xlu0 %1636
        %1640 = vset.pattern.permute.xlu0 0
        %1641 = vperm.xlu0 %1640, %v1603
        %v1642 = vpop.permute.xlu0 %1641
        %v1644 = vmul.f32 %v1607, %v410
        %v1645 = vmul.f32 %v1607, %v414
        %v1646 = vmul.f32 %v1612, %v410
        %v1647 = vmul.f32 %v1612, %v414
        %v1648 = vmul.f32 %v1617, %v410
        %v1649 = vmul.f32 %v1617, %v414
        %v1650 = vmul.f32 %v1622, %v410
        %v1651 = vmul.f32 %v1622, %v414
        %v1652 = vmul.f32 %v1627, %v410
        %v1653 = vmul.f32 %v1627, %v414
        %v1654 = vmul.f32 %v1632, %v410
        %v1655 = vmul.f32 %v1632, %v414
        %v1656 = vmul.f32 %v1637, %v410
        %v1657 = vmul.f32 %v1637, %v414
        %v1658 = vmul.f32 %v1642, %v410
        %v1659 = vmul.f32 %v1642, %v414
        %1660 = vset.pattern.permute.xlu0 1
        %1661 = vperm.xlu0 %1660, %v1596
        %v1662 = vpop.permute.xlu0 %1661
        %1664 = vset.pattern.permute.xlu0 1
        %1665 = vperm.xlu0 %1664, %v1597
        %v1666 = vpop.permute.xlu0 %1665
        %1668 = vset.pattern.permute.xlu0 1
        %1669 = vperm.xlu0 %1668, %v1598
        %v1670 = vpop.permute.xlu0 %1669
        %1672 = vset.pattern.permute.xlu0 1
        %1673 = vperm.xlu0 %1672, %v1599
        %v1674 = vpop.permute.xlu0 %1673
        %1676 = vset.pattern.permute.xlu0 1
        %1677 = vperm.xlu0 %1676, %v1600
        %v1678 = vpop.permute.xlu0 %1677
        %1680 = vset.pattern.permute.xlu0 1
        %1681 = vperm.xlu0 %1680, %v1601
        %v1682 = vpop.permute.xlu0 %1681
        %1684 = vset.pattern.permute.xlu0 1
        %1685 = vperm.xlu0 %1684, %v1602
        %v1686 = vpop.permute.xlu0 %1685
        %1688 = vset.pattern.permute.xlu0 1
        %1689 = vperm.xlu0 %1688, %v1603
        %v1690 = vpop.permute.xlu0 %1689
        %v1692 = vmul.f32 %v1662, %v469
        %v1693 = vmul.f32 %v1662, %v473
        %v1694 = vmul.f32 %v1666, %v469
        %v1695 = vmul.f32 %v1666, %v473
        %v1696 = vmul.f32 %v1670, %v469
        %v1697 = vmul.f32 %v1670, %v473
        %v1698 = vmul.f32 %v1674, %v469
        %v1699 = vmul.f32 %v1674, %v473
        %v1700 = vmul.f32 %v1678, %v469
        %v1701 = vmul.f32 %v1678, %v473
        %v1702 = vmul.f32 %v1682, %v469
        %v1703 = vmul.f32 %v1682, %v473
        %v1704 = vmul.f32 %v1686, %v469
        %v1705 = vmul.f32 %v1686, %v473
        %v1706 = vmul.f32 %v1690, %v469
        %v1707 = vmul.f32 %v1690, %v473
        %v1708 = vadd.f32 %v1644, %v1692
        %v1709 = vadd.f32 %v1645, %v1693
        %v1710 = vadd.f32 %v1646, %v1694
        %v1711 = vadd.f32 %v1647, %v1695
        %v1712 = vadd.f32 %v1648, %v1696
        %v1713 = vadd.f32 %v1649, %v1697
        %v1714 = vadd.f32 %v1650, %v1698
        %v1715 = vadd.f32 %v1651, %v1699
        %v1716 = vadd.f32 %v1652, %v1700
        %v1717 = vadd.f32 %v1653, %v1701
        %v1718 = vadd.f32 %v1654, %v1702
        %v1719 = vadd.f32 %v1655, %v1703
        %v1720 = vadd.f32 %v1656, %v1704
        %v1721 = vadd.f32 %v1657, %v1705
        %v1722 = vadd.f32 %v1658, %v1706
        %v1723 = vadd.f32 %v1659, %v1707
        %1740 = vrot.lane.b32.xlu0 %v1708, 127
        %v1741 = vpop.permute.xlu0 %1740
        %1742 = vrot.lane.b32.xlu0 %v1709, 127
        %v1743 = vpop.permute.xlu0 %1742
        %1744 = vrot.lane.b32.xlu0 %v1710, 127
        %v1745 = vpop.permute.xlu0 %1744
        %1746 = vrot.lane.b32.xlu0 %v1711, 127
        %v1747 = vpop.permute.xlu0 %1746
        %1748 = vrot.lane.b32.xlu0 %v1712, 127
        %v1749 = vpop.permute.xlu0 %1748
        %1750 = vrot.lane.b32.xlu0 %v1713, 127
        %v1751 = vpop.permute.xlu0 %1750
        %1752 = vrot.lane.b32.xlu0 %v1714, 127
        %v1753 = vpop.permute.xlu0 %1752
        %1754 = vrot.lane.b32.xlu0 %v1715, 127
        %v1755 = vpop.permute.xlu0 %1754
        %1756 = vrot.lane.b32.xlu0 %v1716, 127
        %v1757 = vpop.permute.xlu0 %1756
        %1758 = vrot.lane.b32.xlu0 %v1717, 127
        %v1759 = vpop.permute.xlu0 %1758
        %1760 = vrot.lane.b32.xlu0 %v1718, 127
        %v1761 = vpop.permute.xlu0 %1760
        %1762 = vrot.lane.b32.xlu0 %v1719, 127
        %v1763 = vpop.permute.xlu0 %1762
        %1764 = vrot.lane.b32.xlu0 %v1720, 127
        %v1765 = vpop.permute.xlu0 %1764
        %1766 = vrot.lane.b32.xlu0 %v1721, 127
        %v1767 = vpop.permute.xlu0 %1766
        %1768 = vrot.lane.b32.xlu0 %v1722, 127
        %v1769 = vpop.permute.xlu0 %1768
        %1770 = vrot.lane.b32.xlu0 %v1723, 127
        %v1771 = vpop.permute.xlu0 %1770
        %vm1772 = vcmask 1039360
        %v1773 = vsel %vm1772, %v1741, %v1743
        %v1774 = vsel %vm1772, %v1745, %v1747
        %v1775 = vsel %vm1772, %v1749, %v1751
        %v1776 = vsel %vm1772, %v1753, %v1755
        %v1777 = vsel %vm1772, %v1757, %v1759
        %v1778 = vsel %vm1772, %v1761, %v1763
        %v1779 = vsel %vm1772, %v1765, %v1767
        %v1780 = vsel %vm1772, %v1769, %v1771
        %v1805 = vsel %vm1772, %v1743, %v1741
        %v1806 = vsel %vm1772, %v1747, %v1745
        %v1807 = vsel %vm1772, %v1751, %v1749
        %v1808 = vsel %vm1772, %v1755, %v1753
        %v1809 = vsel %vm1772, %v1759, %v1757
        %v1810 = vsel %vm1772, %v1763, %v1761
        %v1811 = vsel %vm1772, %v1767, %v1765
        %v1812 = vsel %vm1772, %v1771, %v1769
        %v1814 = vlaneseq
        %v1815 = vshrl.u32 %v1814, 7
        %v1816 = vsub.s32 0, %v1815
        %v1817 = vrot.slane %v351, %v1816
        %v1818 = vlaneseq
        %v1819 = vshrl.u32 %v1818, 7
        %v1820 = vsub.s32 1, %v1819
        %v1821 = vrot.slane %v351, %v1820
        %v1824 = vmul.f32 %v1817, %v1773
        %v1825 = vmul.f32 %v1821, %v1805
        %v1826 = vmul.f32 %v1817, %v1774
        %v1827 = vmul.f32 %v1821, %v1806
        %v1828 = vmul.f32 %v1817, %v1775
        %v1829 = vmul.f32 %v1821, %v1807
        %v1830 = vmul.f32 %v1817, %v1776
        %v1831 = vmul.f32 %v1821, %v1808
        %v1832 = vmul.f32 %v1817, %v1777
        %v1833 = vmul.f32 %v1821, %v1809
        %v1834 = vmul.f32 %v1817, %v1778
        %v1835 = vmul.f32 %v1821, %v1810
        %v1836 = vmul.f32 %v1817, %v1779
        %v1837 = vmul.f32 %v1821, %v1811
        %v1838 = vmul.f32 %v1817, %v1780
        %v1839 = vmul.f32 %v1821, %v1812
        %v1840 = vadd.f32 %v1579, %v1824
        %v1841 = vadd.f32 %v1580, %v1825
        %v1842 = vadd.f32 %v1581, %v1826
        %v1843 = vadd.f32 %v1582, %v1827
        %v1844 = vadd.f32 %v1583, %v1828
        %v1845 = vadd.f32 %v1584, %v1829
        %v1846 = vadd.f32 %v1585, %v1830
        %v1847 = vadd.f32 %v1586, %v1831
        %v1848 = vadd.f32 %v1587, %v1832
        %v1849 = vadd.f32 %v1588, %v1833
        %v1850 = vadd.f32 %v1589, %v1834
        %v1851 = vadd.f32 %v1590, %v1835
        %v1852 = vadd.f32 %v1591, %v1836
        %v1853 = vadd.f32 %v1592, %v1837
        %v1854 = vadd.f32 %v1593, %v1838
        %v1855 = vadd.f32 %v1594, %v1839
        %s1856 = scalar_lea.vmem %s3, 384
        %v1857 = vld [vmem:[%s1856] sm:$0xff]
        %v1858 = vld [vmem:[%s1856 + $0x8] sm:$0xff]
        %v1859 = vld [vmem:[%s1856 + $0x10] sm:$0xff]
        %v1860 = vld [vmem:[%s1856 + $0x18] sm:$0xff]
        %v1861 = vld [vmem:[%s1856 + $0x20] sm:$0xff]
        %v1862 = vld [vmem:[%s1856 + $0x28] sm:$0xff]
        %v1863 = vld [vmem:[%s1856 + $0x30] sm:$0xff]
        %v1864 = vld [vmem:[%s1856 + $0x38] sm:$0xff]
        %1866 = vset.pattern.permute.xlu0 0
        %1867 = vperm.xlu0 %1866, %v1857
        %v1868 = vpop.permute.xlu0 %1867
        %1871 = vset.pattern.permute.xlu0 0
        %1872 = vperm.xlu0 %1871, %v1858
        %v1873 = vpop.permute.xlu0 %1872
        %1876 = vset.pattern.permute.xlu0 0
        %1877 = vperm.xlu0 %1876, %v1859
        %v1878 = vpop.permute.xlu0 %1877
        %1881 = vset.pattern.permute.xlu0 0
        %1882 = vperm.xlu0 %1881, %v1860
        %v1883 = vpop.permute.xlu0 %1882
        %1886 = vset.pattern.permute.xlu0 0
        %1887 = vperm.xlu0 %1886, %v1861
        %v1888 = vpop.permute.xlu0 %1887
        %1891 = vset.pattern.permute.xlu0 0
        %1892 = vperm.xlu0 %1891, %v1862
        %v1893 = vpop.permute.xlu0 %1892
        %1896 = vset.pattern.permute.xlu0 0
        %1897 = vperm.xlu0 %1896, %v1863
        %v1898 = vpop.permute.xlu0 %1897
        %1901 = vset.pattern.permute.xlu0 0
        %1902 = vperm.xlu0 %1901, %v1864
        %v1903 = vpop.permute.xlu0 %1902
        %v1905 = vmul.f32 %v1868, %v410
        %v1906 = vmul.f32 %v1868, %v414
        %v1907 = vmul.f32 %v1873, %v410
        %v1908 = vmul.f32 %v1873, %v414
        %v1909 = vmul.f32 %v1878, %v410
        %v1910 = vmul.f32 %v1878, %v414
        %v1911 = vmul.f32 %v1883, %v410
        %v1912 = vmul.f32 %v1883, %v414
        %v1913 = vmul.f32 %v1888, %v410
        %v1914 = vmul.f32 %v1888, %v414
        %v1915 = vmul.f32 %v1893, %v410
        %v1916 = vmul.f32 %v1893, %v414
        %v1917 = vmul.f32 %v1898, %v410
        %v1918 = vmul.f32 %v1898, %v414
        %v1919 = vmul.f32 %v1903, %v410
        %v1920 = vmul.f32 %v1903, %v414
        %1921 = vset.pattern.permute.xlu0 1
        %1922 = vperm.xlu0 %1921, %v1857
        %v1923 = vpop.permute.xlu0 %1922
        %1925 = vset.pattern.permute.xlu0 1
        %1926 = vperm.xlu0 %1925, %v1858
        %v1927 = vpop.permute.xlu0 %1926
        %1929 = vset.pattern.permute.xlu0 1
        %1930 = vperm.xlu0 %1929, %v1859
        %v1931 = vpop.permute.xlu0 %1930
        %1933 = vset.pattern.permute.xlu0 1
        %1934 = vperm.xlu0 %1933, %v1860
        %v1935 = vpop.permute.xlu0 %1934
        %1937 = vset.pattern.permute.xlu0 1
        %1938 = vperm.xlu0 %1937, %v1861
        %v1939 = vpop.permute.xlu0 %1938
        %1941 = vset.pattern.permute.xlu0 1
        %1942 = vperm.xlu0 %1941, %v1862
        %v1943 = vpop.permute.xlu0 %1942
        %1945 = vset.pattern.permute.xlu0 1
        %1946 = vperm.xlu0 %1945, %v1863
        %v1947 = vpop.permute.xlu0 %1946
        %1949 = vset.pattern.permute.xlu0 1
        %1950 = vperm.xlu0 %1949, %v1864
        %v1951 = vpop.permute.xlu0 %1950
        %v1953 = vmul.f32 %v1923, %v469
        %v1954 = vmul.f32 %v1923, %v473
        %v1955 = vmul.f32 %v1927, %v469
        %v1956 = vmul.f32 %v1927, %v473
        %v1957 = vmul.f32 %v1931, %v469
        %v1958 = vmul.f32 %v1931, %v473
        %v1959 = vmul.f32 %v1935, %v469
        %v1960 = vmul.f32 %v1935, %v473
        %v1961 = vmul.f32 %v1939, %v469
        %v1962 = vmul.f32 %v1939, %v473
        %v1963 = vmul.f32 %v1943, %v469
        %v1964 = vmul.f32 %v1943, %v473
        %v1965 = vmul.f32 %v1947, %v469
        %v1966 = vmul.f32 %v1947, %v473
        %v1967 = vmul.f32 %v1951, %v469
        %v1968 = vmul.f32 %v1951, %v473
        %v1969 = vadd.f32 %v1905, %v1953
        %v1970 = vadd.f32 %v1906, %v1954
        %v1971 = vadd.f32 %v1907, %v1955
        %v1972 = vadd.f32 %v1908, %v1956
        %v1973 = vadd.f32 %v1909, %v1957
        %v1974 = vadd.f32 %v1910, %v1958
        %v1975 = vadd.f32 %v1911, %v1959
        %v1976 = vadd.f32 %v1912, %v1960
        %v1977 = vadd.f32 %v1913, %v1961
        %v1978 = vadd.f32 %v1914, %v1962
        %v1979 = vadd.f32 %v1915, %v1963
        %v1980 = vadd.f32 %v1916, %v1964
        %v1981 = vadd.f32 %v1917, %v1965
        %v1982 = vadd.f32 %v1918, %v1966
        %v1983 = vadd.f32 %v1919, %v1967
        %v1984 = vadd.f32 %v1920, %v1968
        %2001 = vrot.lane.b32.xlu0 %v1969, 113
        %v2002 = vpop.permute.xlu0 %2001
        %2003 = vrot.lane.b32.xlu0 %v1970, 113
        %v2004 = vpop.permute.xlu0 %2003
        %2005 = vrot.lane.b32.xlu0 %v1971, 113
        %v2006 = vpop.permute.xlu0 %2005
        %2007 = vrot.lane.b32.xlu0 %v1972, 113
        %v2008 = vpop.permute.xlu0 %2007
        %2009 = vrot.lane.b32.xlu0 %v1973, 113
        %v2010 = vpop.permute.xlu0 %2009
        %2011 = vrot.lane.b32.xlu0 %v1974, 113
        %v2012 = vpop.permute.xlu0 %2011
        %2013 = vrot.lane.b32.xlu0 %v1975, 113
        %v2014 = vpop.permute.xlu0 %2013
        %2015 = vrot.lane.b32.xlu0 %v1976, 113
        %v2016 = vpop.permute.xlu0 %2015
        %2017 = vrot.lane.b32.xlu0 %v1977, 113
        %v2018 = vpop.permute.xlu0 %2017
        %2019 = vrot.lane.b32.xlu0 %v1978, 113
        %v2020 = vpop.permute.xlu0 %2019
        %2021 = vrot.lane.b32.xlu0 %v1979, 113
        %v2022 = vpop.permute.xlu0 %2021
        %2023 = vrot.lane.b32.xlu0 %v1980, 113
        %v2024 = vpop.permute.xlu0 %2023
        %2025 = vrot.lane.b32.xlu0 %v1981, 113
        %v2026 = vpop.permute.xlu0 %2025
        %2027 = vrot.lane.b32.xlu0 %v1982, 113
        %v2028 = vpop.permute.xlu0 %2027
        %2029 = vrot.lane.b32.xlu0 %v1983, 113
        %v2030 = vpop.permute.xlu0 %2029
        %2031 = vrot.lane.b32.xlu0 %v1984, 113
        %v2032 = vpop.permute.xlu0 %2031
        %vm2033 = vcmask 924672
        %v2034 = vsel %vm2033, %v2002, %v2004
        %v2035 = vsel %vm2033, %v2006, %v2008
        %v2036 = vsel %vm2033, %v2010, %v2012
        %v2037 = vsel %vm2033, %v2014, %v2016
        %v2038 = vsel %vm2033, %v2018, %v2020
        %v2039 = vsel %vm2033, %v2022, %v2024
        %v2040 = vsel %vm2033, %v2026, %v2028
        %v2041 = vsel %vm2033, %v2030, %v2032
        %v2066 = vsel %vm2033, %v2004, %v2002
        %v2067 = vsel %vm2033, %v2008, %v2006
        %v2068 = vsel %vm2033, %v2012, %v2010
        %v2069 = vsel %vm2033, %v2016, %v2014
        %v2070 = vsel %vm2033, %v2020, %v2018
        %v2071 = vsel %vm2033, %v2024, %v2022
        %v2072 = vsel %vm2033, %v2028, %v2026
        %v2073 = vsel %vm2033, %v2032, %v2030
        %v2075 = vlaneseq
        %v2076 = vshrl.u32 %v2075, 7
        %v2077 = vsub.s32 0, %v2076
        %v2078 = vrot.slane %v353, %v2077
        %v2079 = vlaneseq
        %v2080 = vshrl.u32 %v2079, 7
        %v2081 = vsub.s32 1, %v2080
        %v2082 = vrot.slane %v353, %v2081
        %v2085 = vmul.f32 %v2078, %v2034
        %v2086 = vmul.f32 %v2082, %v2066
        %v2087 = vmul.f32 %v2078, %v2035
        %v2088 = vmul.f32 %v2082, %v2067
        %v2089 = vmul.f32 %v2078, %v2036
        %v2090 = vmul.f32 %v2082, %v2068
        %v2091 = vmul.f32 %v2078, %v2037
        %v2092 = vmul.f32 %v2082, %v2069
        %v2093 = vmul.f32 %v2078, %v2038
        %v2094 = vmul.f32 %v2082, %v2070
        %v2095 = vmul.f32 %v2078, %v2039
        %v2096 = vmul.f32 %v2082, %v2071
        %v2097 = vmul.f32 %v2078, %v2040
        %v2098 = vmul.f32 %v2082, %v2072
        %v2099 = vmul.f32 %v2078, %v2041
        %v2100 = vmul.f32 %v2082, %v2073
        %v2101 = vadd.f32 %v1840, %v2085
        %v2102 = vadd.f32 %v1841, %v2086
        %v2103 = vadd.f32 %v1842, %v2087
        %v2104 = vadd.f32 %v1843, %v2088
        %v2105 = vadd.f32 %v1844, %v2089
        %v2106 = vadd.f32 %v1845, %v2090
        %v2107 = vadd.f32 %v1846, %v2091
        %v2108 = vadd.f32 %v1847, %v2092
        %v2109 = vadd.f32 %v1848, %v2093
        %v2110 = vadd.f32 %v1849, %v2094
        %v2111 = vadd.f32 %v1850, %v2095
        %v2112 = vadd.f32 %v1851, %v2096
        %v2113 = vadd.f32 %v1852, %v2097
        %v2114 = vadd.f32 %v1853, %v2098
        %v2115 = vadd.f32 %v1854, %v2099
        %v2116 = vadd.f32 %v1855, %v2100
        %s2117 = scalar_lea.vmem %s3, 448
        %v2118 = vld [vmem:[%s2117] sm:$0xff]
        %v2119 = vld [vmem:[%s2117 + $0x8] sm:$0xff]
        %v2120 = vld [vmem:[%s2117 + $0x10] sm:$0xff]
        %v2121 = vld [vmem:[%s2117 + $0x18] sm:$0xff]
        %v2122 = vld [vmem:[%s2117 + $0x20] sm:$0xff]
        %v2123 = vld [vmem:[%s2117 + $0x28] sm:$0xff]
        %v2124 = vld [vmem:[%s2117 + $0x30] sm:$0xff]
        %v2125 = vld [vmem:[%s2117 + $0x38] sm:$0xff]
        %2127 = vset.pattern.permute.xlu0 0
        %2128 = vperm.xlu0 %2127, %v2118
        %v2129 = vpop.permute.xlu0 %2128
        %2132 = vset.pattern.permute.xlu0 0
        %2133 = vperm.xlu0 %2132, %v2119
        %v2134 = vpop.permute.xlu0 %2133
        %2137 = vset.pattern.permute.xlu0 0
        %2138 = vperm.xlu0 %2137, %v2120
        %v2139 = vpop.permute.xlu0 %2138
        %2142 = vset.pattern.permute.xlu0 0
        %2143 = vperm.xlu0 %2142, %v2121
        %v2144 = vpop.permute.xlu0 %2143
        %2147 = vset.pattern.permute.xlu0 0
        %2148 = vperm.xlu0 %2147, %v2122
        %v2149 = vpop.permute.xlu0 %2148
        %2152 = vset.pattern.permute.xlu0 0
        %2153 = vperm.xlu0 %2152, %v2123
        %v2154 = vpop.permute.xlu0 %2153
        %2157 = vset.pattern.permute.xlu0 0
        %2158 = vperm.xlu0 %2157, %v2124
        %v2159 = vpop.permute.xlu0 %2158
        %2162 = vset.pattern.permute.xlu0 0
        %2163 = vperm.xlu0 %2162, %v2125
        %v2164 = vpop.permute.xlu0 %2163
        %v2166 = vmul.f32 %v2129, %v410
        %v2167 = vmul.f32 %v2129, %v414
        %v2168 = vmul.f32 %v2134, %v410
        %v2169 = vmul.f32 %v2134, %v414
        %v2170 = vmul.f32 %v2139, %v410
        %v2171 = vmul.f32 %v2139, %v414
        %v2172 = vmul.f32 %v2144, %v410
        %v2173 = vmul.f32 %v2144, %v414
        %v2174 = vmul.f32 %v2149, %v410
        %v2175 = vmul.f32 %v2149, %v414
        %v2176 = vmul.f32 %v2154, %v410
        %v2177 = vmul.f32 %v2154, %v414
        %v2178 = vmul.f32 %v2159, %v410
        %v2179 = vmul.f32 %v2159, %v414
        %v2180 = vmul.f32 %v2164, %v410
        %v2181 = vmul.f32 %v2164, %v414
        %2182 = vset.pattern.permute.xlu0 1
        %2183 = vperm.xlu0 %2182, %v2118
        %v2184 = vpop.permute.xlu0 %2183
        %2186 = vset.pattern.permute.xlu0 1
        %2187 = vperm.xlu0 %2186, %v2119
        %v2188 = vpop.permute.xlu0 %2187
        %2190 = vset.pattern.permute.xlu0 1
        %2191 = vperm.xlu0 %2190, %v2120
        %v2192 = vpop.permute.xlu0 %2191
        %2194 = vset.pattern.permute.xlu0 1
        %2195 = vperm.xlu0 %2194, %v2121
        %v2196 = vpop.permute.xlu0 %2195
        %2198 = vset.pattern.permute.xlu0 1
        %2199 = vperm.xlu0 %2198, %v2122
        %v2200 = vpop.permute.xlu0 %2199
        %2202 = vset.pattern.permute.xlu0 1
        %2203 = vperm.xlu0 %2202, %v2123
        %v2204 = vpop.permute.xlu0 %2203
        %2206 = vset.pattern.permute.xlu0 1
        %2207 = vperm.xlu0 %2206, %v2124
        %v2208 = vpop.permute.xlu0 %2207
        %2210 = vset.pattern.permute.xlu0 1
        %2211 = vperm.xlu0 %2210, %v2125
        %v2212 = vpop.permute.xlu0 %2211
        %v2214 = vmul.f32 %v2184, %v469
        %v2215 = vmul.f32 %v2184, %v473
        %v2216 = vmul.f32 %v2188, %v469
        %v2217 = vmul.f32 %v2188, %v473
        %v2218 = vmul.f32 %v2192, %v469
        %v2219 = vmul.f32 %v2192, %v473
        %v2220 = vmul.f32 %v2196, %v469
        %v2221 = vmul.f32 %v2196, %v473
        %v2222 = vmul.f32 %v2200, %v469
        %v2223 = vmul.f32 %v2200, %v473
        %v2224 = vmul.f32 %v2204, %v469
        %v2225 = vmul.f32 %v2204, %v473
        %v2226 = vmul.f32 %v2208, %v469
        %v2227 = vmul.f32 %v2208, %v473
        %v2228 = vmul.f32 %v2212, %v469
        %v2229 = vmul.f32 %v2212, %v473
        %v2230 = vadd.f32 %v2166, %v2214
        %v2231 = vadd.f32 %v2167, %v2215
        %v2232 = vadd.f32 %v2168, %v2216
        %v2233 = vadd.f32 %v2169, %v2217
        %v2234 = vadd.f32 %v2170, %v2218
        %v2235 = vadd.f32 %v2171, %v2219
        %v2236 = vadd.f32 %v2172, %v2220
        %v2237 = vadd.f32 %v2173, %v2221
        %v2238 = vadd.f32 %v2174, %v2222
        %v2239 = vadd.f32 %v2175, %v2223
        %v2240 = vadd.f32 %v2176, %v2224
        %v2241 = vadd.f32 %v2177, %v2225
        %v2242 = vadd.f32 %v2178, %v2226
        %v2243 = vadd.f32 %v2179, %v2227
        %v2244 = vadd.f32 %v2180, %v2228
        %v2245 = vadd.f32 %v2181, %v2229
        %2262 = vrot.lane.b32.xlu0 %v2230, 112
        %v2263 = vpop.permute.xlu0 %2262
        %2264 = vrot.lane.b32.xlu0 %v2231, 112
        %v2265 = vpop.permute.xlu0 %2264
        %2266 = vrot.lane.b32.xlu0 %v2232, 112
        %v2267 = vpop.permute.xlu0 %2266
        %2268 = vrot.lane.b32.xlu0 %v2233, 112
        %v2269 = vpop.permute.xlu0 %2268
        %2270 = vrot.lane.b32.xlu0 %v2234, 112
        %v2271 = vpop.permute.xlu0 %2270
        %2272 = vrot.lane.b32.xlu0 %v2235, 112
        %v2273 = vpop.permute.xlu0 %2272
        %2274 = vrot.lane.b32.xlu0 %v2236, 112
        %v2275 = vpop.permute.xlu0 %2274
        %2276 = vrot.lane.b32.xlu0 %v2237, 112
        %v2277 = vpop.permute.xlu0 %2276
        %2278 = vrot.lane.b32.xlu0 %v2238, 112
        %v2279 = vpop.permute.xlu0 %2278
        %2280 = vrot.lane.b32.xlu0 %v2239, 112
        %v2281 = vpop.permute.xlu0 %2280
        %2282 = vrot.lane.b32.xlu0 %v2240, 112
        %v2283 = vpop.permute.xlu0 %2282
        %2284 = vrot.lane.b32.xlu0 %v2241, 112
        %v2285 = vpop.permute.xlu0 %2284
        %2286 = vrot.lane.b32.xlu0 %v2242, 112
        %v2287 = vpop.permute.xlu0 %2286
        %2288 = vrot.lane.b32.xlu0 %v2243, 112
        %v2289 = vpop.permute.xlu0 %2288
        %2290 = vrot.lane.b32.xlu0 %v2244, 112
        %v2291 = vpop.permute.xlu0 %2290
        %2292 = vrot.lane.b32.xlu0 %v2245, 112
        %v2293 = vpop.permute.xlu0 %2292
        %vm2294 = vcmask 916480
        %v2295 = vsel %vm2294, %v2263, %v2265
        %v2296 = vsel %vm2294, %v2267, %v2269
        %v2297 = vsel %vm2294, %v2271, %v2273
        %v2298 = vsel %vm2294, %v2275, %v2277
        %v2299 = vsel %vm2294, %v2279, %v2281
        %v2300 = vsel %vm2294, %v2283, %v2285
        %v2301 = vsel %vm2294, %v2287, %v2289
        %v2302 = vsel %vm2294, %v2291, %v2293
        %v2327 = vsel %vm2294, %v2265, %v2263
        %v2328 = vsel %vm2294, %v2269, %v2267
        %v2329 = vsel %vm2294, %v2273, %v2271
        %v2330 = vsel %vm2294, %v2277, %v2275
        %v2331 = vsel %vm2294, %v2281, %v2279
        %v2332 = vsel %vm2294, %v2285, %v2283
        %v2333 = vsel %vm2294, %v2289, %v2287
        %v2334 = vsel %vm2294, %v2293, %v2291
        %v2336 = vlaneseq
        %v2337 = vshrl.u32 %v2336, 7
        %v2338 = vsub.s32 0, %v2337
        %v2339 = vrot.slane %v355, %v2338
        %v2340 = vlaneseq
        %v2341 = vshrl.u32 %v2340, 7
        %v2342 = vsub.s32 1, %v2341
        %v2343 = vrot.slane %v355, %v2342
        %v2346 = vmul.f32 %v2339, %v2295
        %v2347 = vmul.f32 %v2343, %v2327
        %v2348 = vmul.f32 %v2339, %v2296
        %v2349 = vmul.f32 %v2343, %v2328
        %v2350 = vmul.f32 %v2339, %v2297
        %v2351 = vmul.f32 %v2343, %v2329
        %v2352 = vmul.f32 %v2339, %v2298
        %v2353 = vmul.f32 %v2343, %v2330
        %v2354 = vmul.f32 %v2339, %v2299
        %v2355 = vmul.f32 %v2343, %v2331
        %v2356 = vmul.f32 %v2339, %v2300
        %v2357 = vmul.f32 %v2343, %v2332
        %v2358 = vmul.f32 %v2339, %v2301
        %v2359 = vmul.f32 %v2343, %v2333
        %v2360 = vmul.f32 %v2339, %v2302
        %v2361 = vmul.f32 %v2343, %v2334
        %v2362 = vadd.f32 %v2101, %v2346
        %v2363 = vadd.f32 %v2102, %v2347
        %v2364 = vadd.f32 %v2103, %v2348
        %v2365 = vadd.f32 %v2104, %v2349
        %v2366 = vadd.f32 %v2105, %v2350
        %v2367 = vadd.f32 %v2106, %v2351
        %v2368 = vadd.f32 %v2107, %v2352
        %v2369 = vadd.f32 %v2108, %v2353
        %v2370 = vadd.f32 %v2109, %v2354
        %v2371 = vadd.f32 %v2110, %v2355
        %v2372 = vadd.f32 %v2111, %v2356
        %v2373 = vadd.f32 %v2112, %v2357
        %v2374 = vadd.f32 %v2113, %v2358
        %v2375 = vadd.f32 %v2114, %v2359
        %v2376 = vadd.f32 %v2115, %v2360
        %v2377 = vadd.f32 %v2116, %v2361
        %s2378 = scalar_lea.vmem %s3, 512
        %v2379 = vld [vmem:[%s2378] sm:$0xff]
        %v2380 = vld [vmem:[%s2378 + $0x8] sm:$0xff]
        %v2381 = vld [vmem:[%s2378 + $0x10] sm:$0xff]
        %v2382 = vld [vmem:[%s2378 + $0x18] sm:$0xff]
        %v2383 = vld [vmem:[%s2378 + $0x20] sm:$0xff]
        %v2384 = vld [vmem:[%s2378 + $0x28] sm:$0xff]
        %v2385 = vld [vmem:[%s2378 + $0x30] sm:$0xff]
        %v2386 = vld [vmem:[%s2378 + $0x38] sm:$0xff]
        %2388 = vset.pattern.permute.xlu0 0
        %2389 = vperm.xlu0 %2388, %v2379
        %v2390 = vpop.permute.xlu0 %2389
        %2393 = vset.pattern.permute.xlu0 0
        %2394 = vperm.xlu0 %2393, %v2380
        %v2395 = vpop.permute.xlu0 %2394
        %2398 = vset.pattern.permute.xlu0 0
        %2399 = vperm.xlu0 %2398, %v2381
        %v2400 = vpop.permute.xlu0 %2399
        %2403 = vset.pattern.permute.xlu0 0
        %2404 = vperm.xlu0 %2403, %v2382
        %v2405 = vpop.permute.xlu0 %2404
        %2408 = vset.pattern.permute.xlu0 0
        %2409 = vperm.xlu0 %2408, %v2383
        %v2410 = vpop.permute.xlu0 %2409
        %2413 = vset.pattern.permute.xlu0 0
        %2414 = vperm.xlu0 %2413, %v2384
        %v2415 = vpop.permute.xlu0 %2414
        %2418 = vset.pattern.permute.xlu0 0
        %2419 = vperm.xlu0 %2418, %v2385
        %v2420 = vpop.permute.xlu0 %2419
        %2423 = vset.pattern.permute.xlu0 0
        %2424 = vperm.xlu0 %2423, %v2386
        %v2425 = vpop.permute.xlu0 %2424
        %v2427 = vmul.f32 %v2390, %v410
        %v2428 = vmul.f32 %v2390, %v414
        %v2429 = vmul.f32 %v2395, %v410
        %v2430 = vmul.f32 %v2395, %v414
        %v2431 = vmul.f32 %v2400, %v410
        %v2432 = vmul.f32 %v2400, %v414
        %v2433 = vmul.f32 %v2405, %v410
        %v2434 = vmul.f32 %v2405, %v414
        %v2435 = vmul.f32 %v2410, %v410
        %v2436 = vmul.f32 %v2410, %v414
        %v2437 = vmul.f32 %v2415, %v410
        %v2438 = vmul.f32 %v2415, %v414
        %v2439 = vmul.f32 %v2420, %v410
        %v2440 = vmul.f32 %v2420, %v414
        %v2441 = vmul.f32 %v2425, %v410
        %v2442 = vmul.f32 %v2425, %v414
        %2443 = vset.pattern.permute.xlu0 1
        %2444 = vperm.xlu0 %2443, %v2379
        %v2445 = vpop.permute.xlu0 %2444
        %2447 = vset.pattern.permute.xlu0 1
        %2448 = vperm.xlu0 %2447, %v2380
        %v2449 = vpop.permute.xlu0 %2448
        %2451 = vset.pattern.permute.xlu0 1
        %2452 = vperm.xlu0 %2451, %v2381
        %v2453 = vpop.permute.xlu0 %2452
        %2455 = vset.pattern.permute.xlu0 1
        %2456 = vperm.xlu0 %2455, %v2382
        %v2457 = vpop.permute.xlu0 %2456
        %2459 = vset.pattern.permute.xlu0 1
        %2460 = vperm.xlu0 %2459, %v2383
        %v2461 = vpop.permute.xlu0 %2460
        %2463 = vset.pattern.permute.xlu0 1
        %2464 = vperm.xlu0 %2463, %v2384
        %v2465 = vpop.permute.xlu0 %2464
        %2467 = vset.pattern.permute.xlu0 1
        %2468 = vperm.xlu0 %2467, %v2385
        %v2469 = vpop.permute.xlu0 %2468
        %2471 = vset.pattern.permute.xlu0 1
        %2472 = vperm.xlu0 %2471, %v2386
        %v2473 = vpop.permute.xlu0 %2472
        %v2475 = vmul.f32 %v2445, %v469
        %v2476 = vmul.f32 %v2445, %v473
        %v2477 = vmul.f32 %v2449, %v469
        %v2478 = vmul.f32 %v2449, %v473
        %v2479 = vmul.f32 %v2453, %v469
        %v2480 = vmul.f32 %v2453, %v473
        %v2481 = vmul.f32 %v2457, %v469
        %v2482 = vmul.f32 %v2457, %v473
        %v2483 = vmul.f32 %v2461, %v469
        %v2484 = vmul.f32 %v2461, %v473
        %v2485 = vmul.f32 %v2465, %v469
        %v2486 = vmul.f32 %v2465, %v473
        %v2487 = vmul.f32 %v2469, %v469
        %v2488 = vmul.f32 %v2469, %v473
        %v2489 = vmul.f32 %v2473, %v469
        %v2490 = vmul.f32 %v2473, %v473
        %v2491 = vadd.f32 %v2427, %v2475
        %v2492 = vadd.f32 %v2428, %v2476
        %v2493 = vadd.f32 %v2429, %v2477
        %v2494 = vadd.f32 %v2430, %v2478
        %v2495 = vadd.f32 %v2431, %v2479
        %v2496 = vadd.f32 %v2432, %v2480
        %v2497 = vadd.f32 %v2433, %v2481
        %v2498 = vadd.f32 %v2434, %v2482
        %v2499 = vadd.f32 %v2435, %v2483
        %v2500 = vadd.f32 %v2436, %v2484
        %v2501 = vadd.f32 %v2437, %v2485
        %v2502 = vadd.f32 %v2438, %v2486
        %v2503 = vadd.f32 %v2439, %v2487
        %v2504 = vadd.f32 %v2440, %v2488
        %v2505 = vadd.f32 %v2441, %v2489
        %v2506 = vadd.f32 %v2442, %v2490
        %2523 = vrot.lane.b32.xlu0 %v2491, 111
        %v2524 = vpop.permute.xlu0 %2523
        %2525 = vrot.lane.b32.xlu0 %v2492, 111
        %v2526 = vpop.permute.xlu0 %2525
        %2527 = vrot.lane.b32.xlu0 %v2493, 111
        %v2528 = vpop.permute.xlu0 %2527
        %2529 = vrot.lane.b32.xlu0 %v2494, 111
        %v2530 = vpop.permute.xlu0 %2529
        %2531 = vrot.lane.b32.xlu0 %v2495, 111
        %v2532 = vpop.permute.xlu0 %2531
        %2533 = vrot.lane.b32.xlu0 %v2496, 111
        %v2534 = vpop.permute.xlu0 %2533
        %2535 = vrot.lane.b32.xlu0 %v2497, 111
        %v2536 = vpop.permute.xlu0 %2535
        %2537 = vrot.lane.b32.xlu0 %v2498, 111
        %v2538 = vpop.permute.xlu0 %2537
        %2539 = vrot.lane.b32.xlu0 %v2499, 111
        %v2540 = vpop.permute.xlu0 %2539
        %2541 = vrot.lane.b32.xlu0 %v2500, 111
        %v2542 = vpop.permute.xlu0 %2541
        %2543 = vrot.lane.b32.xlu0 %v2501, 111
        %v2544 = vpop.permute.xlu0 %2543
        %2545 = vrot.lane.b32.xlu0 %v2502, 111
        %v2546 = vpop.permute.xlu0 %2545
        %2547 = vrot.lane.b32.xlu0 %v2503, 111
        %v2548 = vpop.permute.xlu0 %2547
        %2549 = vrot.lane.b32.xlu0 %v2504, 111
        %v2550 = vpop.permute.xlu0 %2549
        %2551 = vrot.lane.b32.xlu0 %v2505, 111
        %v2552 = vpop.permute.xlu0 %2551
        %2553 = vrot.lane.b32.xlu0 %v2506, 111
        %v2554 = vpop.permute.xlu0 %2553
        %vm2555 = vcmask 908288
        %v2556 = vsel %vm2555, %v2524, %v2526
        %v2557 = vsel %vm2555, %v2528, %v2530
        %v2558 = vsel %vm2555, %v2532, %v2534
        %v2559 = vsel %vm2555, %v2536, %v2538
        %v2560 = vsel %vm2555, %v2540, %v2542
        %v2561 = vsel %vm2555, %v2544, %v2546
        %v2562 = vsel %vm2555, %v2548, %v2550
        %v2563 = vsel %vm2555, %v2552, %v2554
        %v2588 = vsel %vm2555, %v2526, %v2524
        %v2589 = vsel %vm2555, %v2530, %v2528
        %v2590 = vsel %vm2555, %v2534, %v2532
        %v2591 = vsel %vm2555, %v2538, %v2536
        %v2592 = vsel %vm2555, %v2542, %v2540
        %v2593 = vsel %vm2555, %v2546, %v2544
        %v2594 = vsel %vm2555, %v2550, %v2548
        %v2595 = vsel %vm2555, %v2554, %v2552
        %v2597 = vlaneseq
        %v2598 = vshrl.u32 %v2597, 7
        %v2599 = vsub.s32 0, %v2598
        %v2600 = vrot.slane %v357, %v2599
        %v2601 = vlaneseq
        %v2602 = vshrl.u32 %v2601, 7
        %v2603 = vsub.s32 1, %v2602
        %v2604 = vrot.slane %v357, %v2603
        %v2607 = vmul.f32 %v2600, %v2556
        %v2608 = vmul.f32 %v2604, %v2588
        %v2609 = vmul.f32 %v2600, %v2557
        %v2610 = vmul.f32 %v2604, %v2589
        %v2611 = vmul.f32 %v2600, %v2558
        %v2612 = vmul.f32 %v2604, %v2590
        %v2613 = vmul.f32 %v2600, %v2559
        %v2614 = vmul.f32 %v2604, %v2591
        %v2615 = vmul.f32 %v2600, %v2560
        %v2616 = vmul.f32 %v2604, %v2592
        %v2617 = vmul.f32 %v2600, %v2561
        %v2618 = vmul.f32 %v2604, %v2593
        %v2619 = vmul.f32 %v2600, %v2562
        %v2620 = vmul.f32 %v2604, %v2594
        %v2621 = vmul.f32 %v2600, %v2563
        %v2622 = vmul.f32 %v2604, %v2595
        %v2623 = vadd.f32 %v2362, %v2607
        %v2624 = vadd.f32 %v2363, %v2608
        %v2625 = vadd.f32 %v2364, %v2609
        %v2626 = vadd.f32 %v2365, %v2610
        %v2627 = vadd.f32 %v2366, %v2611
        %v2628 = vadd.f32 %v2367, %v2612
        %v2629 = vadd.f32 %v2368, %v2613
        %v2630 = vadd.f32 %v2369, %v2614
        %v2631 = vadd.f32 %v2370, %v2615
        %v2632 = vadd.f32 %v2371, %v2616
        %v2633 = vadd.f32 %v2372, %v2617
        %v2634 = vadd.f32 %v2373, %v2618
        %v2635 = vadd.f32 %v2374, %v2619
        %v2636 = vadd.f32 %v2375, %v2620
        %v2637 = vadd.f32 %v2376, %v2621
        %v2638 = vadd.f32 %v2377, %v2622
        %v2639 = vld [vmem:[%s4] sm:$0xff]
        %v2640 = vld [vmem:[%s4 + $0x8] sm:$0xff]
        %v2641 = vld [vmem:[%s4 + $0x10] sm:$0xff]
        %v2642 = vld [vmem:[%s4 + $0x18] sm:$0xff]
        %v2643 = vld [vmem:[%s4 + $0x20] sm:$0xff]
        %v2644 = vld [vmem:[%s4 + $0x28] sm:$0xff]
        %v2645 = vld [vmem:[%s4 + $0x30] sm:$0xff]
        %v2646 = vld [vmem:[%s4 + $0x38] sm:$0xff]
        %2648 = vset.pattern.permute.xlu0 0
        %2649 = vperm.xlu0 %2648, %v2639
        %v2650 = vpop.permute.xlu0 %2649
        %2653 = vset.pattern.permute.xlu0 0
        %2654 = vperm.xlu0 %2653, %v2640
        %v2655 = vpop.permute.xlu0 %2654
        %2658 = vset.pattern.permute.xlu0 0
        %2659 = vperm.xlu0 %2658, %v2641
        %v2660 = vpop.permute.xlu0 %2659
        %2663 = vset.pattern.permute.xlu0 0
        %2664 = vperm.xlu0 %2663, %v2642
        %v2665 = vpop.permute.xlu0 %2664
        %2668 = vset.pattern.permute.xlu0 0
        %2669 = vperm.xlu0 %2668, %v2643
        %v2670 = vpop.permute.xlu0 %2669
        %2673 = vset.pattern.permute.xlu0 0
        %2674 = vperm.xlu0 %2673, %v2644
        %v2675 = vpop.permute.xlu0 %2674
        %2678 = vset.pattern.permute.xlu0 0
        %2679 = vperm.xlu0 %2678, %v2645
        %v2680 = vpop.permute.xlu0 %2679
        %2683 = vset.pattern.permute.xlu0 0
        %2684 = vperm.xlu0 %2683, %v2646
        %v2685 = vpop.permute.xlu0 %2684
        %v2687 = vadd.f32 %v2623, %v2650
        %v2688 = vadd.f32 %v2624, %v2650
        %v2689 = vadd.f32 %v2625, %v2655
        %v2690 = vadd.f32 %v2626, %v2655
        %v2691 = vadd.f32 %v2627, %v2660
        %v2692 = vadd.f32 %v2628, %v2660
        %v2693 = vadd.f32 %v2629, %v2665
        %v2694 = vadd.f32 %v2630, %v2665
        %v2695 = vadd.f32 %v2631, %v2670
        %v2696 = vadd.f32 %v2632, %v2670
        %v2697 = vadd.f32 %v2633, %v2675
        %v2698 = vadd.f32 %v2634, %v2675
        %v2699 = vadd.f32 %v2635, %v2680
        %v2700 = vadd.f32 %v2636, %v2680
        %v2701 = vadd.f32 %v2637, %v2685
        %v2702 = vadd.f32 %v2638, %v2685
        %v2703 = vld [vmem:[%s5] sm:$0xff]
        %v2704 = vld [vmem:[%s5 + $0x8] sm:$0xff]
        %v2705 = vld [vmem:[%s5 + $0x10] sm:$0xff]
        %v2706 = vld [vmem:[%s5 + $0x18] sm:$0xff]
        %v2707 = vld [vmem:[%s5 + $0x20] sm:$0xff]
        %v2708 = vld [vmem:[%s5 + $0x28] sm:$0xff]
        %v2709 = vld [vmem:[%s5 + $0x30] sm:$0xff]
        %v2710 = vld [vmem:[%s5 + $0x38] sm:$0xff]
        %v2711 = vld [vmem:[%s5 + $0x40] sm:$0xff]
        %vm2712 = vcmask 523264
        %v2714 = vsel %vm2712, %v2703, 0
        %v2717 = vsel %vm2712, %v2704, 0
        %v2720 = vsel %vm2712, %v2705, 0
        %v2723 = vsel %vm2712, %v2706, 0
        %v2726 = vsel %vm2712, %v2707, 0
        %v2729 = vsel %vm2712, %v2708, 0
        %v2732 = vsel %vm2712, %v2709, 0
        %v2735 = vsel %vm2712, %v2710, 0
        %v2738 = vsel %vm2712, %v2711, 0
        %2740 = vmatprep.subr.mxu0 %v2688
        %2741 = vmatpush1.msra.mxu0 %v2687
        %2742 = vmatprep.subr.mxu0 %v2690
        %2743 = vmatpush1.msra.mxu0 %v2689
        %2744 = vmatprep.subr.mxu0 %v2692
        %2745 = vmatpush1.msra.mxu0 %v2691
        %2746 = vmatprep.subr.mxu0 %v2694
        %2747 = vmatpush1.msra.mxu0 %v2693
        %2748 = vmatprep.subr.mxu0 %v2696
        %2749 = vmatpush1.msra.mxu0 %v2695
        %2750 = vmatprep.subr.mxu0 %v2698
        %2751 = vmatpush1.msra.mxu0 %v2697
        %2752 = vmatprep.subr.mxu0 %v2700
        %2753 = vmatpush1.msra.mxu0 %v2699
        %2754 = vmatprep.subr.mxu0 %v2702
        %2755 = vmatpush1.msra.mxu0 %v2701
        %2756 = vmatprep.subr.mxu0 0.0
        %2757 = vmatpush1.msra.mxu0 0.0
        %2758 = vmatprep.subr.mxu0 0.0
        %2759 = vmatpush1.msra.mxu0 0.0
        %2760 = vmatprep.subr.mxu0 0.0
        %2761 = vmatpush1.msra.mxu0 0.0
        %2762 = vmatprep.subr.mxu0 0.0
        %2763 = vmatpush1.msra.mxu0 0.0
        %2764 = vmatprep.subr.mxu0 0.0
        %2765 = vmatpush1.msra.mxu0 0.0
        %2766 = vmatprep.subr.mxu0 0.0
        %2767 = vmatpush1.msra.mxu0 0.0
        %2768 = vmatprep.subr.mxu0 0.0
        %2769 = vmatpush1.msra.mxu0 0.0
        %2770 = vmatprep.subr.mxu0 0.0
        %2771 = vmatpush1.msra.mxu0 0.0
        %2772 = vmatprep.subr.mxu0 0.0
        %2773 = vmatpush1.msra.mxu0 0.0
        %2774 = vmatprep.subr.mxu0 0.0
        %2775 = vmatpush1.msra.mxu0 0.0
        %2776 = vmatprep.subr.mxu0 0.0
        %2777 = vmatpush1.msra.mxu0 0.0
        %2778 = vmatprep.subr.mxu0 0.0
        %2779 = vmatpush1.msra.mxu0 0.0
        %2780 = vmatprep.subr.mxu0 0.0
        %2781 = vmatpush1.msra.mxu0 0.0
        %2782 = vmatprep.subr.mxu0 0.0
        %2783 = vmatpush1.msra.mxu0 0.0
        %2784 = vmatprep.subr.mxu0 0.0
        %2785 = vmatpush1.msra.mxu0 0.0
        %2786 = vmatprep.subr.mxu0 0.0
        %2787 = vmatpush1.msra.mxu0 0.0
        %2788 = vmatprep.subr.mxu0 0.0
        %2789 = vmatpush1.msra.mxu0 0.0
        %2790 = vmatprep.subr.mxu0 0.0
        %2791 = vmatpush1.msra.mxu0 0.0
        %2792 = vmatprep.subr.mxu0 0.0
        %2793 = vmatpush1.msra.mxu0 0.0
        %2794 = vmatprep.subr.mxu0 0.0
        %2795 = vmatpush1.msra.mxu0 0.0
        %2796 = vmatprep.subr.mxu0 0.0
        %2797 = vmatpush1.msra.mxu0 0.0
        %2798 = vmatprep.subr.mxu0 0.0
        %2799 = vmatpush1.msra.mxu0 0.0
        %2800 = vmatprep.subr.mxu0 0.0
        %2801 = vmatpush1.msra.mxu0 0.0
        %2802 = vmatprep.subr.mxu0 0.0
        %2803 = vmatpush1.msra.mxu0 0.0
        %2804 = vmatprep.mubr.f32.mxu0 0.0
        %2805 = vmatmul.mubr.f32.gmra.mrb[0].mxu0 %v2714
        %v2806 = vpop.f32.mrb[0].mxu0
        %v2807 = vadd.f32 0.0, %v2806
        %v2808 = vpop.f32.mrb[0].mxu0
        %v2809 = vadd.f32 0.0, %v2808
        %2810 = vmatprep.mubr.f32.mxu0 0.0
        %2811 = vmatmul.mubr.f32.gmra.mrb[0].mxu0 %v2717
        %v2812 = vpop.f32.mrb[0].mxu0
        %v2813 = vadd.f32 0.0, %v2812
        %v2814 = vpop.f32.mrb[0].mxu0
        %v2815 = vadd.f32 0.0, %v2814
        %2816 = vmatprep.mubr.f32.mxu0 0.0
        %2817 = vmatmul.mubr.f32.gmra.mrb[0].mxu0 %v2720
        %v2818 = vpop.f32.mrb[0].mxu0
        %v2819 = vadd.f32 0.0, %v2818
        %v2820 = vpop.f32.mrb[0].mxu0
        %v2821 = vadd.f32 0.0, %v2820
        %2822 = vmatprep.mubr.f32.mxu0 0.0
        %2823 = vmatmul.mubr.f32.gmra.mrb[0].mxu0 %v2723
        %v2824 = vpop.f32.mrb[0].mxu0
        %v2825 = vadd.f32 0.0, %v2824
        %v2826 = vpop.f32.mrb[0].mxu0
        %v2827 = vadd.f32 0.0, %v2826
        %2828 = vmatprep.mubr.f32.mxu0 0.0
        %2829 = vmatmul.mubr.f32.gmra.mrb[0].mxu0 %v2726
        %v2830 = vpop.f32.mrb[0].mxu0
        %v2831 = vadd.f32 0.0, %v2830
        %v2832 = vpop.f32.mrb[0].mxu0
        %v2833 = vadd.f32 0.0, %v2832
        %2834 = vmatprep.mubr.f32.mxu0 0.0
        %2835 = vmatmul.mubr.f32.gmra.mrb[0].mxu0 %v2729
        %v2836 = vpop.f32.mrb[0].mxu0
        %v2837 = vadd.f32 0.0, %v2836
        %v2838 = vpop.f32.mrb[0].mxu0
        %v2839 = vadd.f32 0.0, %v2838
        %2840 = vmatprep.mubr.f32.mxu0 0.0
        %2841 = vmatmul.mubr.f32.gmra.mrb[0].mxu0 %v2732
        %v2842 = vpop.f32.mrb[0].mxu0
        %v2843 = vadd.f32 0.0, %v2842
        %v2844 = vpop.f32.mrb[0].mxu0
        %v2845 = vadd.f32 0.0, %v2844
        %2846 = vmatprep.mubr.f32.mxu0 0.0
        %2847 = vmatmul.mubr.f32.gmra.mrb[0].mxu0 %v2735
        %v2848 = vpop.f32.mrb[0].mxu0
        %v2849 = vadd.f32 0.0, %v2848
        %v2850 = vpop.f32.mrb[0].mxu0
        %v2851 = vadd.f32 0.0, %v2850
        %2852 = vmatprep.mubr.f32.mxu0 0.0
        %2853 = vmatmul.mubr.f32.gmra.mrb[0].mxu0 %v2738
        %v2854 = vpop.f32.mrb[0].mxu0
        %v2855 = vadd.f32 0.0, %v2854
        %v2856 = vpop.f32.mrb[0].mxu0
        %v2857 = vadd.f32 0.0, %v2856
        %2858 = vdwg.mxu0
        %2860 = vrot.lane.b32.xlu0 %v2809, 17
        %v2861 = vpop.permute.xlu0 %2860
        %2864 = vrot.lane.b32.xlu0 %v2807, 17
        %v2865 = vpop.permute.xlu0 %2864
        %v2866 = vsel %vm564, %v2865, %v2861
        %v2869 = vsel %vm564, %v2861, %v2865
        %v2870 = vmul.f32 %v601, %v2869
        %v2871 = vmul.f32 %v605, %v2866
        %v2872 = vadd.f32 %v2870, 0.0
        %v2873 = vadd.f32 %v2871, 0.0
        %2875 = vrot.lane.b32.xlu0 %v2815, 16
        %v2876 = vpop.permute.xlu0 %2875
        %2879 = vrot.lane.b32.xlu0 %v2813, 16
        %v2880 = vpop.permute.xlu0 %2879
        %v2881 = vsel %vm825, %v2880, %v2876
        %v2884 = vsel %vm825, %v2876, %v2880
        %v2885 = vmul.f32 %v862, %v2884
        %v2886 = vmul.f32 %v866, %v2881
        %v2887 = vadd.f32 %v2872, %v2885
        %v2888 = vadd.f32 %v2873, %v2886
        %2890 = vrot.lane.b32.xlu0 %v2821, 15
        %v2891 = vpop.permute.xlu0 %2890
        %2894 = vrot.lane.b32.xlu0 %v2819, 15
        %v2895 = vpop.permute.xlu0 %2894
        %v2896 = vsel %vm1086, %v2895, %v2891
        %v2899 = vsel %vm1086, %v2891, %v2895
        %v2900 = vmul.f32 %v1123, %v2899
        %v2901 = vmul.f32 %v1127, %v2896
        %v2902 = vadd.f32 %v2887, %v2900
        %v2903 = vadd.f32 %v2888, %v2901
        %2905 = vrot.lane.b32.xlu0 %v2827, 1
        %v2906 = vpop.permute.xlu0 %2905
        %2909 = vrot.lane.b32.xlu0 %v2825, 1
        %v2910 = vpop.permute.xlu0 %2909
        %v2911 = vsel %vm1347, %v2910, %v2906
        %v2914 = vsel %vm1347, %v2906, %v2910
        %v2915 = vmul.f32 %v1384, %v2914
        %v2916 = vmul.f32 %v1388, %v2911
        %v2917 = vadd.f32 %v2902, %v2915
        %v2918 = vadd.f32 %v2903, %v2916
        %v2919 = vmul.f32 %v1556, %v2831
        %v2920 = vmul.f32 %v1560, %v2833
        %v2921 = vadd.f32 %v2917, %v2919
        %v2922 = vadd.f32 %v2918, %v2920
        %2925 = vrot.lane.b32.xlu0 %v2837, 127
        %v2926 = vpop.permute.xlu0 %2925
        %2927 = vrot.lane.b32.xlu0 %v2839, 127
        %v2928 = vpop.permute.xlu0 %2927
        %v2929 = vsel %vm1772, %v2926, %v2928
        %v2933 = vsel %vm1772, %v2928, %v2926
        %v2934 = vmul.f32 %v1817, %v2929
        %v2935 = vmul.f32 %v1821, %v2933
        %v2936 = vadd.f32 %v2921, %v2934
        %v2937 = vadd.f32 %v2922, %v2935
        %2940 = vrot.lane.b32.xlu0 %v2843, 113
        %v2941 = vpop.permute.xlu0 %2940
        %2942 = vrot.lane.b32.xlu0 %v2845, 113
        %v2943 = vpop.permute.xlu0 %2942
        %v2944 = vsel %vm2033, %v2941, %v2943
        %v2948 = vsel %vm2033, %v2943, %v2941
        %v2949 = vmul.f32 %v2078, %v2944
        %v2950 = vmul.f32 %v2082, %v2948
        %v2951 = vadd.f32 %v2936, %v2949
        %v2952 = vadd.f32 %v2937, %v2950
        %2955 = vrot.lane.b32.xlu0 %v2849, 112
        %v2956 = vpop.permute.xlu0 %2955
        %2957 = vrot.lane.b32.xlu0 %v2851, 112
        %v2958 = vpop.permute.xlu0 %2957
        %v2959 = vsel %vm2294, %v2956, %v2958
        %v2963 = vsel %vm2294, %v2958, %v2956
        %v2964 = vmul.f32 %v2339, %v2959
        %v2965 = vmul.f32 %v2343, %v2963
        %v2966 = vadd.f32 %v2951, %v2964
        %v2967 = vadd.f32 %v2952, %v2965
        %2970 = vrot.lane.b32.xlu0 %v2855, 111
        %v2971 = vpop.permute.xlu0 %2970
        %2972 = vrot.lane.b32.xlu0 %v2857, 111
        %v2973 = vpop.permute.xlu0 %2972
        %v2974 = vsel %vm2555, %v2971, %v2973
        %v2978 = vsel %vm2555, %v2973, %v2971
        %v2979 = vmul.f32 %v2600, %v2974
        %v2980 = vmul.f32 %v2604, %v2978
        %v2981 = vadd.f32 %v2966, %v2979
        %v2982 = vadd.f32 %v2967, %v2980
        %v2983 = vld [vmem:[%s6] sm:$0xff]
        %2985 = vset.pattern.permute.xlu0 0
        %2986 = vperm.xlu0 %2985, %v2983
        %v2987 = vpop.permute.xlu0 %2986
        %v2989 = vadd.f32 %v2981, %v2987
        %v2990 = vadd.f32 %v2982, %v2987
        %v2993 = vcombine.high %v2989, %v2990
        %v2995 = vmul.f32 %v338, %v2993
        %v2996 = vcombine.low %v2989, %v2990
        %v2998 = vadd.f32 %v2995, %v2996
        %2999 = vst [vmem:[%s324] sm:$0xff] %v2998
        %s3000 = sand.u32 %s213, 1
        %s3001 = scalar_lea.sflag [#allocation3], %s3000
        %s3002 = sand.u32 %s213, 1
        %s3003 = smul.addr %s3002, 8
        %s3004 = scalar_lea.vmem [#allocation2], %s3003
        // Predicated region
        $region53: #{tpu_custom_call.1} parent=51 // pred_check
          %p3005 = pneg %p223
        $region54: #{tpu_custom_call.1} parent=51 // pred_check_branch
          %3007 = sbr.rel (%p3005) target = $region56
        $region55: #{tpu_custom_call.1} parent=51 // pred_region
          %s3009 = ssub.s32 128, 128
          %3010 = vsyncadd %s3001, %s3009
          %s3011 = smul.addr %s22, 2
          %s3012 = smul.addr %s3011, 64
          %s3013 = scalar_lea.hbm %s8, %s3012
          %s3015 = sshll.u32 %s3004, 4
          %s3016 = int_to_ptr.vmem [resolvable:$true] %s3015
          %3018 = dma.vmem_to_hbm [thread:$0]  %s3016, 128, %s3013, %s3001
        $region56: #{tpu_custom_call.1} parent=51 // pred_fallthru
          _
      $region52: #{tpu_custom_call.1} parent=5 // pred_fallthru
        _
      %p3019 = scmp.le.s32.totalorder 2, %s17
      // Predicated region
      $region57: #{tpu_custom_call.1} parent=5 // pred_check
        %p3020 = pneg %p3019
      $region58: #{tpu_custom_call.1} parent=5 // pred_check_branch
        %3022 = sbr.rel (%p3020) target = $region60
      $region59: #{tpu_custom_call.1} parent=5 // pred_region
        %s3023 = ssub.s32 %s17, 2
        // Predicated region
        $region61: #{tpu_custom_call.1} parent=59 // pred_check
          %p3024 = pneg %p229
        $region62: #{tpu_custom_call.1} parent=59 // pred_check_branch
          %3026 = sbr.rel (%p3024) target = $region64
        $region63: #{tpu_custom_call.1} parent=59 // pred_region
          %s3027 = sand.u32 %s214, 1
          %s3028 = scalar_lea.sflag [#allocation3], %s3027
          %s3029 = sand.u32 %s214, 1
          %s3030 = smul.addr %s3029, 8
          %s3031 = scalar_lea.vmem [#allocation2], %s3030
          %3032 = dma.done %s3028, 128
        $region64: #{tpu_custom_call.1} parent=59 // pred_fallthru
          _
      $region60: #{tpu_custom_call.1} parent=5 // pred_fallthru
        _
    $region6: #{tpu_custom_call.1} parent=1 // loop_footer
      %s21 = sadd.s32 1, %s17
    $region7: #{tpu_custom_call.1} parent=1 // loop_footer_branch
      %16 = sbr.rel target = $region3
    $region8: #{tpu_custom_call.1} parent=1 // loop_exit
      _
    %3033 = vsyncpa [#allocation3], 1
    %s3034 = scalar_lea.sflag [#allocation3], 1
    %3035 = vsyncpa %s3034, 1

</llo_original>
